<compile_context>
chip_gen: v5e
topology: v5e:2x2
jax: 0.10.0
libtpu: 0.0.40
codegen_flags: <defaults>
</compile_context>

<pallas_src>
import functools

import jax
import jax.numpy as jnp
from jax import lax
from jax.experimental import pallas as pl
from jax.experimental.pallas import tpu as pltpu


# ----------------------------------------------------------------------------
# Fused kernel factory
# ----------------------------------------------------------------------------
def _make_fused_kernel(T, H, rnn_layers, gin_layers, n_edges):
    """Build the fused forward kernel for static (T, H, layer counts, E)."""

    def kernel(*refs):
        # -------- unpack refs (inputs..., out_ref last) -------------------
        idx = 0
        x_ref = refs[idx]; idx += 1            # (T, B, I)  VMEM
        edge_ref = refs[idx]; idx += 1         # (2, E)     SMEM int32
        lstm_w = []
        for _ in range(rnn_layers):            # fused (W_blk, b_cat) per layer
            lstm_w.append((refs[idx], refs[idx + 1])); idx += 2
        fcw_ref, fcb_ref, bw_ref, bb_ref = refs[idx:idx + 4]; idx += 4
        gin_w = []
        for _ in range(gin_layers):
            gin_w.append(tuple(refs[idx:idx + 4])); idx += 4
        fw_ref, fb_ref = refs[idx:idx + 2]; idx += 2
        out_ref = refs[idx]

        B = x_ref.shape[1]

        x3 = x_ref[...]                        # (T, B, I)
        xs = [x3[t] for t in range(T)]         # T x (B, I), major-dim indexing

        # -------- bidirectional LSTM, fwd+rev fused, time loop unrolled ----
        def bilstm_layer(seq, w_ref, b_ref):
            # seq: list of T (B, F) arrays
            W = w_ref[...]                     # (2F + 2H, 8H) block structure
            b = b_ref[...]                     # (1, 8H) = [b_fwd | b_rev]
            h_f = jnp.zeros((B, H), jnp.float32)
            h_r = jnp.zeros((B, H), jnp.float32)
            c_f = jnp.zeros((B, H), jnp.float32)
            c_r = jnp.zeros((B, H), jnp.float32)
            outs_f = [None] * T
            outs_r = [None] * T

            def cell(g, c):                    # PyTorch gate order i, f, g, o
                i = jax.nn.sigmoid(g[:, 0 * H:1 * H])
                f = jax.nn.sigmoid(g[:, 1 * H:2 * H])
                gg = jnp.tanh(g[:, 2 * H:3 * H])
                o = jax.nn.sigmoid(g[:, 3 * H:4 * H])
                c_new = f * c + i * gg
                return o * jnp.tanh(c_new), c_new

            for s in range(T):
                tf, tr = s, T - 1 - s          # fwd time / rev time (lockstep)
                inp = jnp.concatenate([seq[tf], seq[tr], h_f, h_r], axis=1)
                gates = (jnp.dot(inp, W, preferred_element_type=jnp.float32)
                         + b)                  # (B, 8H) single matmul / step
                h_f, c_f = cell(gates[:, :4 * H], c_f)
                h_r, c_r = cell(gates[:, 4 * H:], c_r)
                outs_f[tf] = h_f
                outs_r[tr] = h_r
            return outs_f, outs_r

        seq = xs
        outs_f = outs_r = None
        for layer in range(rnn_layers):
            outs_f, outs_r = bilstm_layer(seq, *lstm_w[layer])
            if layer + 1 < rnn_layers:
                seq = [jnp.concatenate([outs_f[t], outs_r[t]], axis=1)
                       for t in range(T)]
        # Model: H = rnn_out[:, :, :H] + rnn_out[:, :, H:]  (fwd + rev halves)
        hsum = [outs_f[t] + outs_r[t] for t in range(T)]    # T x (B, H)

        # -------- Attention (bilinear score + softmax over T) --------------
        fcw = fcw_ref[...]
        fcb = fcb_ref[...]
        fc_seq = [jnp.dot(hsum[t], fcw, preferred_element_type=jnp.float32)
                  + fcb for t in range(T)]                  # T x (B, H)
        # TODO(synk): reference calls Attention with a single arg; lstm_hidden
        # is taken to be the last timestep of H (fc applied == last fc_seq).
        fc_hid = fc_seq[T - 1]                              # (B, H)
        v = jnp.dot(fc_hid, bw_ref[...],
                    preferred_element_type=jnp.float32)     # (B, H)
        bb = bb_ref[...]                                    # (1, 1)
        cols = [jnp.sum(fc_seq[t] * v, axis=1, keepdims=True) + bb
                for t in range(T)]                          # T x (B, 1)
        # online softmax over T (no (B,T) materialization / relayout)
        m = cols[0]
        for t in range(1, T):
            m = jnp.maximum(m, cols[t])
        ps = [jnp.exp(cols[t] - m) for t in range(T)]
        denom = ps[0]
        for t in range(1, T):
            denom = denom + ps[t]
        inv = 1.0 / denom
        r = fc_seq[0] * (ps[0] * inv)
        for t in range(1, T):
            r = r + fc_seq[t] * (ps[t] * inv)               # (B, H)

        # -------- GIN: dense adjacency built in-kernel from SMEM edge list -
        N = B
        rows = lax.broadcasted_iota(jnp.int32, (N, N), 0)
        colsi = lax.broadcasted_iota(jnp.int32, (N, N), 1)
        A = jnp.zeros((N, N), jnp.float32)
        for e in range(n_edges):                            # A[dst, src] += 1
            src = edge_ref[0, e]
            dst = edge_ref[1, e]
            A = A + jnp.where((rows == dst) & (colsi == src), 1.0, 0.0)

        h = r
        for (w1_ref, b1_ref, w2_ref, b2_ref) in gin_w:
            agg = h + jnp.dot(A, h, preferred_element_type=jnp.float32)
            z = (jnp.dot(agg, w1_ref[...], preferred_element_type=jnp.float32)
                 + b1_ref[...])
            z = jnp.maximum(z, 0.0)
            h = (jnp.dot(z, w2_ref[...], preferred_element_type=jnp.float32)
                 + b2_ref[...])

        # -------- tanh -> dropout(identity, eval) -> fc ---------------------
        z = jnp.tanh(h)
        out_ref[...] = (jnp.dot(z, fw_ref[...],
                                preferred_element_type=jnp.float32)
                        + fb_ref[...])

    return kernel


# ----------------------------------------------------------------------------
# Wrapper: one pallas_call for the whole forward pass
# ----------------------------------------------------------------------------
def _fuse_bilstm_weights(fwd, rev):
    """Build the block weight so both LSTM directions run in one matmul/step.

    Row layout matches the in-kernel concat [x_tf | x_tr | h_f | h_r]; column
    layout is [fwd gates (4H) | rev gates (4H)].
    """
    wih_f, whh_f, b_f = fwd                    # (F,4H), (H,4H), (1,4H)
    wih_r, whh_r, b_r = rev
    F, G = wih_f.shape
    Hh = whh_f.shape[0]
    zi = jnp.zeros((F, G), jnp.float32)
    zh = jnp.zeros((Hh, G), jnp.float32)
    W = jnp.concatenate([
        jnp.concatenate([wih_f, zi], axis=1),
        jnp.concatenate([zi, wih_r], axis=1),
        jnp.concatenate([whh_f, zh], axis=1),
        jnp.concatenate([zh, whh_r], axis=1),
    ], axis=0)                                 # (2F + 2H, 8H)
    b = jnp.concatenate([b_f, b_r], axis=1)    # (1, 8H)
    return W, b


def model_forward(params, x, edge_index):
    B, T, _ = x.shape
    H = params["lstm"][0][0][1].shape[0]        # whh_t: (H, 4H)
    n_classes = params["fc"][0].shape[1]
    rnn_layers = len(params["lstm"])
    gin_layers = len(params["gin"])
    n_edges = edge_index.shape[1]

    flat_w = []
    for fwd, rev in params["lstm"]:
        W, b = _fuse_bilstm_weights(fwd, rev)   # constant-folded under jit
        flat_w += [W, b]
    flat_w += list(params["attn"])
    for g in params["gin"]:
        flat_w += list(g)
    flat_w += list(params["fc"])

    kernel = _make_fused_kernel(T, H, rnn_layers, gin_layers, n_edges)

    # (T, B, I): per-timestep access inside the kernel is a major-dim index.
    x_tbi = jnp.transpose(x, (1, 0, 2))

    in_specs = ([pl.BlockSpec(memory_space=pltpu.MemorySpace.VMEM),
                 pl.BlockSpec(memory_space=pltpu.MemorySpace.SMEM)]
                + [pl.BlockSpec(memory_space=pltpu.MemorySpace.VMEM)]
                * len(flat_w))

    return pl.pallas_call(
        kernel,
        out_shape=jax.ShapeDtypeStruct((B, n_classes), jnp.float32),
        in_specs=in_specs,
        out_specs=pl.BlockSpec(memory_space=pltpu.MemorySpace.VMEM),
    )(x_tbi, edge_index.astype(jnp.int32), *flat_w)


# ----------------------------------------------------------------------------
# Parameter init (deterministic, PyTorch-style uniform(-1/sqrt(fan), 1/sqrt(fan)))
# ----------------------------------------------------------------------------
def _uniform(key, shape, fan_in):
    bound = 1.0 / float(fan_in) ** 0.5
    return jax.random.uniform(key, shape, jnp.float32, -bound, bound)


def init_params(key, input_size, rnn_size, rnn_layers, hidden_dim, n_classes,
                gin_layers=2):
    H = rnn_size
    keys = iter(jax.random.split(key, 256))
    params = {}

    # Bidirectional multi-layer LSTM (stored pre-transposed, bias = b_ih + b_hh)
    lstm = []
    for layer in range(rnn_layers):
        in_size = input_size if layer == 0 else 2 * H
        dirs = []
        for _ in range(2):  # forward, reverse
            wih = _uniform(next(keys), (4 * H, in_size), H)
            whh = _uniform(next(keys), (4 * H, H), H)
            b_ih = _uniform(next(keys), (4 * H,), H)
            b_hh = _uniform(next(keys), (4 * H,), H)
            dirs.append((wih.T, whh.T, (b_ih + b_hh).reshape(1, 4 * H)))
        lstm.append(tuple(dirs))
    params["lstm"] = lstm
    # TODO(synk): BiLSTM.fc (hidden*2 -> n_classes) is dead under the
    # interpretation that Model consumes the raw LSTM sequence output.

    # Attention: Linear(D, D) + Bilinear(D, D, 1)
    D = H
    fc_w = _uniform(next(keys), (D, D), D)
    fc_b = _uniform(next(keys), (D,), D)
    bil_w = _uniform(next(keys), (1, D, D), D)
    bil_b = _uniform(next(keys), (1,), D)
    params["attn"] = (fc_w.T, fc_b.reshape(1, D), bil_w[0].T,
                      bil_b.reshape(1, 1))

    # GIN: layer dims rnn->hidden, (hidden->hidden)*, hidden->rnn
    io = ([(rnn_size, hidden_dim)]
          + [(hidden_dim, hidden_dim)] * (gin_layers - 2)
          + [(hidden_dim, rnn_size)])
    gin = []
    for cin, cout in io:
        w1 = _uniform(next(keys), (cout, cin), cin)
        b1 = _uniform(next(keys), (cout,), cin)
        w2 = _uniform(next(keys), (cout, cout), cout)
        b2 = _uniform(next(keys), (cout,), cout)
        gin.append((w1.T, b1.reshape(1, cout), w2.T, b2.reshape(1, cout)))
    params["gin"] = gin

    # Final classifier Linear(rnn_size, n_classes)
    fw = _uniform(next(keys), (n_classes, rnn_size), rnn_size)
    fb = _uniform(next(keys), (n_classes,), rnn_size)
    params["fc"] = (fw.T, fb.reshape(1, n_classes))
    return params


if __name__ == "__main__":
    # opt: input_size=8, rnn_size=32, rnn_layers=1, n_classes=4, hidden_dim=32,
    #      gin_layers=2, dropout_rate=0.1 (eval -> identity)
    input_size, rnn_size, rnn_layers = 8, 32, 1
    hidden_dim, n_classes, gin_layers = 32, 4, 2
    B, T = 4, 8

    key = jax.random.PRNGKey(0)
    kx, kp = jax.random.split(key)
    x = jax.random.normal(kx, (B, T, input_size), jnp.float32)
    edge_index = jnp.array([[0, 1, 2, 3, 1],
                            [1, 2, 3, 0, 0]], dtype=jnp.int32)

    params = init_params(kp, input_size, rnn_size, rnn_layers, hidden_dim,
                         n_classes, gin_layers)

    fwd = jax.jit(functools.partial(model_forward, params))
    out = fwd(x, edge_index)
    jax.block_until_ready(out)
    assert out.shape == (B, n_classes), out.shape
    assert bool(jnp.all(jnp.isfinite(out)))
    print("KERNEL_OK")
</pallas_src>

<mosaic_0001>
module attributes {stable_mosaic.version = 11 : i64} {
  func.func @kernel(%arg0: memref<8x4x8xf32, #tpu.memory_space<vmem>>, %arg1: memref<2x5xi32, #tpu.memory_space<smem>>, %arg2: memref<80x256xf32, #tpu.memory_space<vmem>>, %arg3: memref<1x256xf32, #tpu.memory_space<vmem>>, %arg4: memref<32x32xf32, #tpu.memory_space<vmem>>, %arg5: memref<1x32xf32, #tpu.memory_space<vmem>>, %arg6: memref<32x32xf32, #tpu.memory_space<vmem>>, %arg7: memref<1x1xf32, #tpu.memory_space<vmem>>, %arg8: memref<32x32xf32, #tpu.memory_space<vmem>>, %arg9: memref<1x32xf32, #tpu.memory_space<vmem>>, %arg10: memref<32x32xf32, #tpu.memory_space<vmem>>, %arg11: memref<1x32xf32, #tpu.memory_space<vmem>>, %arg12: memref<32x32xf32, #tpu.memory_space<vmem>>, %arg13: memref<1x32xf32, #tpu.memory_space<vmem>>, %arg14: memref<32x32xf32, #tpu.memory_space<vmem>>, %arg15: memref<1x32xf32, #tpu.memory_space<vmem>>, %arg16: memref<32x4xf32, #tpu.memory_space<vmem>>, %arg17: memref<1x4xf32, #tpu.memory_space<vmem>>, %arg18: memref<4x4xf32, #tpu.memory_space<vmem>>) attributes {dimension_semantics = [], scalar_prefetch = 0 : i64, scratch_operands = 0 : i64, tpu.core_type = #tpu.core_type<tc>} {
    %c0 = arith.constant 0 : index
    %c0_0 = arith.constant 0 : index
    %c0_1 = arith.constant 0 : index
    %0 = vector.load %arg0[%c0, %c0_0, %c0_1] : memref<8x4x8xf32, #tpu.memory_space<vmem>>, vector<8x4x8xf32>
    %1 = vector.extract_strided_slice %0 {offsets = [0, 0, 0], sizes = [1, 4, 8], strides = [1, 1, 1]} : vector<8x4x8xf32> to vector<1x4x8xf32>
    %2 = vector.shape_cast %1 : vector<1x4x8xf32> to vector<4x8xf32>
    %3 = vector.extract_strided_slice %0 {offsets = [1, 0, 0], sizes = [1, 4, 8], strides = [1, 1, 1]} : vector<8x4x8xf32> to vector<1x4x8xf32>
    %4 = vector.shape_cast %3 : vector<1x4x8xf32> to vector<4x8xf32>
    %5 = vector.extract_strided_slice %0 {offsets = [2, 0, 0], sizes = [1, 4, 8], strides = [1, 1, 1]} : vector<8x4x8xf32> to vector<1x4x8xf32>
    %6 = vector.shape_cast %5 : vector<1x4x8xf32> to vector<4x8xf32>
    %7 = vector.extract_strided_slice %0 {offsets = [3, 0, 0], sizes = [1, 4, 8], strides = [1, 1, 1]} : vector<8x4x8xf32> to vector<1x4x8xf32>
    %8 = vector.shape_cast %7 : vector<1x4x8xf32> to vector<4x8xf32>
    %9 = vector.extract_strided_slice %0 {offsets = [4, 0, 0], sizes = [1, 4, 8], strides = [1, 1, 1]} : vector<8x4x8xf32> to vector<1x4x8xf32>
    %10 = vector.shape_cast %9 : vector<1x4x8xf32> to vector<4x8xf32>
    %11 = vector.extract_strided_slice %0 {offsets = [5, 0, 0], sizes = [1, 4, 8], strides = [1, 1, 1]} : vector<8x4x8xf32> to vector<1x4x8xf32>
    %12 = vector.shape_cast %11 : vector<1x4x8xf32> to vector<4x8xf32>
    %13 = vector.extract_strided_slice %0 {offsets = [6, 0, 0], sizes = [1, 4, 8], strides = [1, 1, 1]} : vector<8x4x8xf32> to vector<1x4x8xf32>
    %14 = vector.shape_cast %13 : vector<1x4x8xf32> to vector<4x8xf32>
    %15 = vector.extract_strided_slice %0 {offsets = [7, 0, 0], sizes = [1, 4, 8], strides = [1, 1, 1]} : vector<8x4x8xf32> to vector<1x4x8xf32>
    %16 = vector.shape_cast %15 : vector<1x4x8xf32> to vector<4x8xf32>
    %c0_2 = arith.constant 0 : index
    %c0_3 = arith.constant 0 : index
    %17 = vector.load %arg2[%c0_2, %c0_3] : memref<80x256xf32, #tpu.memory_space<vmem>>, vector<80x256xf32>
    %c0_4 = arith.constant 0 : index
    %c0_5 = arith.constant 0 : index
    %18 = vector.load %arg3[%c0_4, %c0_5] : memref<1x256xf32, #tpu.memory_space<vmem>>, vector<1x256xf32>
    %cst = arith.constant 0.000000e+00 : f32
    %19 = vector.broadcast %cst : f32 to vector<4x32xf32>
    %cst_6 = arith.constant 0.000000e+00 : f32
    %20 = vector.broadcast %cst_6 : f32 to vector<4x32xf32>
    %cst_7 = arith.constant 0.000000e+00 : f32
    %21 = vector.broadcast %cst_7 : f32 to vector<4x32xf32>
    %cst_8 = arith.constant 0.000000e+00 : f32
    %22 = vector.broadcast %cst_8 : f32 to vector<4x32xf32>
    %23 = tpu.concatenate %2, %16, %19, %20 in 1 : vector<4x8xf32>, vector<4x8xf32>, vector<4x32xf32>, vector<4x32xf32> -> vector<4x80xf32>
    %cst_9 = arith.constant dense<0.000000e+00> : vector<4x256xf32>
    %24 = tpu.matmul %23, %17, %cst_9 {dimension_numbers = #tpu.dot_dimension_numbers<[1], [0], [0], [1], [0, 0, 1, 1], [], []>} : vector<4x80xf32>, vector<80x256xf32>, vector<4x256xf32> -> vector<4x256xf32>
    %25 = vector.broadcast %18 : vector<1x256xf32> to vector<4x256xf32>
    %26 = arith.addf %24, %25 : vector<4x256xf32>
    %27 = vector.extract_strided_slice %26 {offsets = [0, 0], sizes = [4, 128], strides = [1, 1]} : vector<4x256xf32> to vector<4x128xf32>
    %28 = vector.extract_strided_slice %27 {offsets = [0, 0], sizes = [4, 32], strides = [1, 1]} : vector<4x128xf32> to vector<4x32xf32>
    %29 = arith.negf %28 : vector<4x32xf32>
    %30 = math.exp %29 : vector<4x32xf32>
    %cst_10 = arith.constant 1.000000e+00 : f32
    %31 = vector.broadcast %cst_10 : f32 to vector<4x32xf32>
    %32 = arith.addf %31, %30 : vector<4x32xf32>
    %33 = arith.divf %31, %32 : vector<4x32xf32>
    %34 = vector.extract_strided_slice %27 {offsets = [0, 32], sizes = [4, 32], strides = [1, 1]} : vector<4x128xf32> to vector<4x32xf32>
    %35 = arith.negf %34 : vector<4x32xf32>
    %36 = math.exp %35 : vector<4x32xf32>
    %cst_11 = arith.constant 1.000000e+00 : f32
    %37 = vector.broadcast %cst_11 : f32 to vector<4x32xf32>
    %38 = arith.addf %37, %36 : vector<4x32xf32>
    %39 = arith.divf %37, %38 : vector<4x32xf32>
    %40 = vector.extract_strided_slice %27 {offsets = [0, 64], sizes = [4, 32], strides = [1, 1]} : vector<4x128xf32> to vector<4x32xf32>
    %41 = math.tanh %40 : vector<4x32xf32>
    %42 = vector.extract_strided_slice %27 {offsets = [0, 96], sizes = [4, 32], strides = [1, 1]} : vector<4x128xf32> to vector<4x32xf32>
    %43 = arith.negf %42 : vector<4x32xf32>
    %44 = math.exp %43 : vector<4x32xf32>
    %cst_12 = arith.constant 1.000000e+00 : f32
    %45 = vector.broadcast %cst_12 : f32 to vector<4x32xf32>
    %46 = arith.addf %45, %44 : vector<4x32xf32>
    %47 = arith.divf %45, %46 : vector<4x32xf32>
    %48 = arith.mulf %39, %21 : vector<4x32xf32>
    %49 = arith.mulf %33, %41 : vector<4x32xf32>
    %50 = arith.addf %48, %49 : vector<4x32xf32>
    %51 = math.tanh %50 : vector<4x32xf32>
    %52 = arith.mulf %47, %51 : vector<4x32xf32>
    %53 = vector.extract_strided_slice %26 {offsets = [0, 128], sizes = [4, 128], strides = [1, 1]} : vector<4x256xf32> to vector<4x128xf32>
    %54 = vector.extract_strided_slice %53 {offsets = [0, 0], sizes = [4, 32], strides = [1, 1]} : vector<4x128xf32> to vector<4x32xf32>
    %55 = arith.negf %54 : vector<4x32xf32>
    %56 = math.exp %55 : vector<4x32xf32>
    %cst_13 = arith.constant 1.000000e+00 : f32
    %57 = vector.broadcast %cst_13 : f32 to vector<4x32xf32>
    %58 = arith.addf %57, %56 : vector<4x32xf32>
    %59 = arith.divf %57, %58 : vector<4x32xf32>
    %60 = vector.extract_strided_slice %53 {offsets = [0, 32], sizes = [4, 32], strides = [1, 1]} : vector<4x128xf32> to vector<4x32xf32>
    %61 = arith.negf %60 : vector<4x32xf32>
    %62 = math.exp %61 : vector<4x32xf32>
    %cst_14 = arith.constant 1.000000e+00 : f32
    %63 = vector.broadcast %cst_14 : f32 to vector<4x32xf32>
    %64 = arith.addf %63, %62 : vector<4x32xf32>
    %65 = arith.divf %63, %64 : vector<4x32xf32>
    %66 = vector.extract_strided_slice %53 {offsets = [0, 64], sizes = [4, 32], strides = [1, 1]} : vector<4x128xf32> to vector<4x32xf32>
    %67 = math.tanh %66 : vector<4x32xf32>
    %68 = vector.extract_strided_slice %53 {offsets = [0, 96], sizes = [4, 32], strides = [1, 1]} : vector<4x128xf32> to vector<4x32xf32>
    %69 = arith.negf %68 : vector<4x32xf32>
    %70 = math.exp %69 : vector<4x32xf32>
    %cst_15 = arith.constant 1.000000e+00 : f32
    %71 = vector.broadcast %cst_15 : f32 to vector<4x32xf32>
    %72 = arith.addf %71, %70 : vector<4x32xf32>
    %73 = arith.divf %71, %72 : vector<4x32xf32>
    %74 = arith.mulf %65, %22 : vector<4x32xf32>
    %75 = arith.mulf %59, %67 : vector<4x32xf32>
    %76 = arith.addf %74, %75 : vector<4x32xf32>
    %77 = math.tanh %76 : vector<4x32xf32>
    %78 = arith.mulf %73, %77 : vector<4x32xf32>
    %79 = tpu.concatenate %4, %14, %52, %78 in 1 : vector<4x8xf32>, vector<4x8xf32>, vector<4x32xf32>, vector<4x32xf32> -> vector<4x80xf32>
    %cst_16 = arith.constant dense<0.000000e+00> : vector<4x256xf32>
    %80 = tpu.matmul %79, %17, %cst_16 {dimension_numbers = #tpu.dot_dimension_numbers<[1], [0], [0], [1], [0, 0, 1, 1], [], []>} : vector<4x80xf32>, vector<80x256xf32>, vector<4x256xf32> -> vector<4x256xf32>
    %81 = vector.broadcast %18 : vector<1x256xf32> to vector<4x256xf32>
    %82 = arith.addf %80, %81 : vector<4x256xf32>
    %83 = vector.extract_strided_slice %82 {offsets = [0, 0], sizes = [4, 128], strides = [1, 1]} : vector<4x256xf32> to vector<4x128xf32>
    %84 = vector.extract_strided_slice %83 {offsets = [0, 0], sizes = [4, 32], strides = [1, 1]} : vector<4x128xf32> to vector<4x32xf32>
    %85 = arith.negf %84 : vector<4x32xf32>
    %86 = math.exp %85 : vector<4x32xf32>
    %cst_17 = arith.constant 1.000000e+00 : f32
    %87 = vector.broadcast %cst_17 : f32 to vector<4x32xf32>
    %88 = arith.addf %87, %86 : vector<4x32xf32>
    %89 = arith.divf %87, %88 : vector<4x32xf32>
    %90 = vector.extract_strided_slice %83 {offsets = [0, 32], sizes = [4, 32], strides = [1, 1]} : vector<4x128xf32> to vector<4x32xf32>
    %91 = arith.negf %90 : vector<4x32xf32>
    %92 = math.exp %91 : vector<4x32xf32>
    %cst_18 = arith.constant 1.000000e+00 : f32
    %93 = vector.broadcast %cst_18 : f32 to vector<4x32xf32>
    %94 = arith.addf %93, %92 : vector<4x32xf32>
    %95 = arith.divf %93, %94 : vector<4x32xf32>
    %96 = vector.extract_strided_slice %83 {offsets = [0, 64], sizes = [4, 32], strides = [1, 1]} : vector<4x128xf32> to vector<4x32xf32>
    %97 = math.tanh %96 : vector<4x32xf32>
    %98 = vector.extract_strided_slice %83 {offsets = [0, 96], sizes = [4, 32], strides = [1, 1]} : vector<4x128xf32> to vector<4x32xf32>
    %99 = arith.negf %98 : vector<4x32xf32>
    %100 = math.exp %99 : vector<4x32xf32>
    %cst_19 = arith.constant 1.000000e+00 : f32
    %101 = vector.broadcast %cst_19 : f32 to vector<4x32xf32>
    %102 = arith.addf %101, %100 : vector<4x32xf32>
    %103 = arith.divf %101, %102 : vector<4x32xf32>
    %104 = arith.mulf %95, %50 : vector<4x32xf32>
    %105 = arith.mulf %89, %97 : vector<4x32xf32>
    %106 = arith.addf %104, %105 : vector<4x32xf32>
    %107 = math.tanh %106 : vector<4x32xf32>
    %108 = arith.mulf %103, %107 : vector<4x32xf32>
    %109 = vector.extract_strided_slice %82 {offsets = [0, 128], sizes = [4, 128], strides = [1, 1]} : vector<4x256xf32> to vector<4x128xf32>
    %110 = vector.extract_strided_slice %109 {offsets = [0, 0], sizes = [4, 32], strides = [1, 1]} : vector<4x128xf32> to vector<4x32xf32>
    %111 = arith.negf %110 : vector<4x32xf32>
    %112 = math.exp %111 : vector<4x32xf32>
    %cst_20 = arith.constant 1.000000e+00 : f32
    %113 = vector.broadcast %cst_20 : f32 to vector<4x32xf32>
    %114 = arith.addf %113, %112 : vector<4x32xf32>
    %115 = arith.divf %113, %114 : vector<4x32xf32>
    %116 = vector.extract_strided_slice %109 {offsets = [0, 32], sizes = [4, 32], strides = [1, 1]} : vector<4x128xf32> to vector<4x32xf32>
    %117 = arith.negf %116 : vector<4x32xf32>
    %118 = math.exp %117 : vector<4x32xf32>
    %cst_21 = arith.constant 1.000000e+00 : f32
    %119 = vector.broadcast %cst_21 : f32 to vector<4x32xf32>
    %120 = arith.addf %119, %118 : vector<4x32xf32>
    %121 = arith.divf %119, %120 : vector<4x32xf32>
    %122 = vector.extract_strided_slice %109 {offsets = [0, 64], sizes = [4, 32], strides = [1, 1]} : vector<4x128xf32> to vector<4x32xf32>
    %123 = math.tanh %122 : vector<4x32xf32>
    %124 = vector.extract_strided_slice %109 {offsets = [0, 96], sizes = [4, 32], strides = [1, 1]} : vector<4x128xf32> to vector<4x32xf32>
    %125 = arith.negf %124 : vector<4x32xf32>
    %126 = math.exp %125 : vector<4x32xf32>
    %cst_22 = arith.constant 1.000000e+00 : f32
    %127 = vector.broadcast %cst_22 : f32 to vector<4x32xf32>
    %128 = arith.addf %127, %126 : vector<4x32xf32>
    %129 = arith.divf %127, %128 : vector<4x32xf32>
    %130 = arith.mulf %121, %76 : vector<4x32xf32>
    %131 = arith.mulf %115, %123 : vector<4x32xf32>
    %132 = arith.addf %130, %131 : vector<4x32xf32>
    %133 = math.tanh %132 : vector<4x32xf32>
    %134 = arith.mulf %129, %133 : vector<4x32xf32>
    %135 = tpu.concatenate %6, %12, %108, %134 in 1 : vector<4x8xf32>, vector<4x8xf32>, vector<4x32xf32>, vector<4x32xf32> -> vector<4x80xf32>
    %cst_23 = arith.constant dense<0.000000e+00> : vector<4x256xf32>
    %136 = tpu.matmul %135, %17, %cst_23 {dimension_numbers = #tpu.dot_dimension_numbers<[1], [0], [0], [1], [0, 0, 1, 1], [], []>} : vector<4x80xf32>, vector<80x256xf32>, vector<4x256xf32> -> vector<4x256xf32>
    %137 = vector.broadcast %18 : vector<1x256xf32> to vector<4x256xf32>
    %138 = arith.addf %136, %137 : vector<4x256xf32>
    %139 = vector.extract_strided_slice %138 {offsets = [0, 0], sizes = [4, 128], strides = [1, 1]} : vector<4x256xf32> to vector<4x128xf32>
    %140 = vector.extract_strided_slice %139 {offsets = [0, 0], sizes = [4, 32], strides = [1, 1]} : vector<4x128xf32> to vector<4x32xf32>
    %141 = arith.negf %140 : vector<4x32xf32>
    %142 = math.exp %141 : vector<4x32xf32>
    %cst_24 = arith.constant 1.000000e+00 : f32
    %143 = vector.broadcast %cst_24 : f32 to vector<4x32xf32>
    %144 = arith.addf %143, %142 : vector<4x32xf32>
    %145 = arith.divf %143, %144 : vector<4x32xf32>
    %146 = vector.extract_strided_slice %139 {offsets = [0, 32], sizes = [4, 32], strides = [1, 1]} : vector<4x128xf32> to vector<4x32xf32>
    %147 = arith.negf %146 : vector<4x32xf32>
    %148 = math.exp %147 : vector<4x32xf32>
    %cst_25 = arith.constant 1.000000e+00 : f32
    %149 = vector.broadcast %cst_25 : f32 to vector<4x32xf32>
    %150 = arith.addf %149, %148 : vector<4x32xf32>
    %151 = arith.divf %149, %150 : vector<4x32xf32>
    %152 = vector.extract_strided_slice %139 {offsets = [0, 64], sizes = [4, 32], strides = [1, 1]} : vector<4x128xf32> to vector<4x32xf32>
    %153 = math.tanh %152 : vector<4x32xf32>
    %154 = vector.extract_strided_slice %139 {offsets = [0, 96], sizes = [4, 32], strides = [1, 1]} : vector<4x128xf32> to vector<4x32xf32>
    %155 = arith.negf %154 : vector<4x32xf32>
    %156 = math.exp %155 : vector<4x32xf32>
    %cst_26 = arith.constant 1.000000e+00 : f32
    %157 = vector.broadcast %cst_26 : f32 to vector<4x32xf32>
    %158 = arith.addf %157, %156 : vector<4x32xf32>
    %159 = arith.divf %157, %158 : vector<4x32xf32>
    %160 = arith.mulf %151, %106 : vector<4x32xf32>
    %161 = arith.mulf %145, %153 : vector<4x32xf32>
    %162 = arith.addf %160, %161 : vector<4x32xf32>
    %163 = math.tanh %162 : vector<4x32xf32>
    %164 = arith.mulf %159, %163 : vector<4x32xf32>
    %165 = vector.extract_strided_slice %138 {offsets = [0, 128], sizes = [4, 128], strides = [1, 1]} : vector<4x256xf32> to vector<4x128xf32>
    %166 = vector.extract_strided_slice %165 {offsets = [0, 0], sizes = [4, 32], strides = [1, 1]} : vector<4x128xf32> to vector<4x32xf32>
    %167 = arith.negf %166 : vector<4x32xf32>
    %168 = math.exp %167 : vector<4x32xf32>
    %cst_27 = arith.constant 1.000000e+00 : f32
    %169 = vector.broadcast %cst_27 : f32 to vector<4x32xf32>
    %170 = arith.addf %169, %168 : vector<4x32xf32>
    %171 = arith.divf %169, %170 : vector<4x32xf32>
    %172 = vector.extract_strided_slice %165 {offsets = [0, 32], sizes = [4, 32], strides = [1, 1]} : vector<4x128xf32> to vector<4x32xf32>
    %173 = arith.negf %172 : vector<4x32xf32>
    %174 = math.exp %173 : vector<4x32xf32>
    %cst_28 = arith.constant 1.000000e+00 : f32
    %175 = vector.broadcast %cst_28 : f32 to vector<4x32xf32>
    %176 = arith.addf %175, %174 : vector<4x32xf32>
    %177 = arith.divf %175, %176 : vector<4x32xf32>
    %178 = vector.extract_strided_slice %165 {offsets = [0, 64], sizes = [4, 32], strides = [1, 1]} : vector<4x128xf32> to vector<4x32xf32>
    %179 = math.tanh %178 : vector<4x32xf32>
    %180 = vector.extract_strided_slice %165 {offsets = [0, 96], sizes = [4, 32], strides = [1, 1]} : vector<4x128xf32> to vector<4x32xf32>
    %181 = arith.negf %180 : vector<4x32xf32>
    %182 = math.exp %181 : vector<4x32xf32>
    %cst_29 = arith.constant 1.000000e+00 : f32
    %183 = vector.broadcast %cst_29 : f32 to vector<4x32xf32>
    %184 = arith.addf %183, %182 : vector<4x32xf32>
    %185 = arith.divf %183, %184 : vector<4x32xf32>
    %186 = arith.mulf %177, %132 : vector<4x32xf32>
    %187 = arith.mulf %171, %179 : vector<4x32xf32>
    %188 = arith.addf %186, %187 : vector<4x32xf32>
    %189 = math.tanh %188 : vector<4x32xf32>
    %190 = arith.mulf %185, %189 : vector<4x32xf32>
    %191 = tpu.concatenate %8, %10, %164, %190 in 1 : vector<4x8xf32>, vector<4x8xf32>, vector<4x32xf32>, vector<4x32xf32> -> vector<4x80xf32>
    %cst_30 = arith.constant dense<0.000000e+00> : vector<4x256xf32>
    %192 = tpu.matmul %191, %17, %cst_30 {dimension_numbers = #tpu.dot_dimension_numbers<[1], [0], [0], [1], [0, 0, 1, 1], [], []>} : vector<4x80xf32>, vector<80x256xf32>, vector<4x256xf32> -> vector<4x256xf32>
    %193 = vector.broadcast %18 : vector<1x256xf32> to vector<4x256xf32>
    %194 = arith.addf %192, %193 : vector<4x256xf32>
    %195 = vector.extract_strided_slice %194 {offsets = [0, 0], sizes = [4, 128], strides = [1, 1]} : vector<4x256xf32> to vector<4x128xf32>
    %196 = vector.extract_strided_slice %195 {offsets = [0, 0], sizes = [4, 32], strides = [1, 1]} : vector<4x128xf32> to vector<4x32xf32>
    %197 = arith.negf %196 : vector<4x32xf32>
    %198 = math.exp %197 : vector<4x32xf32>
    %cst_31 = arith.constant 1.000000e+00 : f32
    %199 = vector.broadcast %cst_31 : f32 to vector<4x32xf32>
    %200 = arith.addf %199, %198 : vector<4x32xf32>
    %201 = arith.divf %199, %200 : vector<4x32xf32>
    %202 = vector.extract_strided_slice %195 {offsets = [0, 32], sizes = [4, 32], strides = [1, 1]} : vector<4x128xf32> to vector<4x32xf32>
    %203 = arith.negf %202 : vector<4x32xf32>
    %204 = math.exp %203 : vector<4x32xf32>
    %cst_32 = arith.constant 1.000000e+00 : f32
    %205 = vector.broadcast %cst_32 : f32 to vector<4x32xf32>
    %206 = arith.addf %205, %204 : vector<4x32xf32>
    %207 = arith.divf %205, %206 : vector<4x32xf32>
    %208 = vector.extract_strided_slice %195 {offsets = [0, 64], sizes = [4, 32], strides = [1, 1]} : vector<4x128xf32> to vector<4x32xf32>
    %209 = math.tanh %208 : vector<4x32xf32>
    %210 = vector.extract_strided_slice %195 {offsets = [0, 96], sizes = [4, 32], strides = [1, 1]} : vector<4x128xf32> to vector<4x32xf32>
    %211 = arith.negf %210 : vector<4x32xf32>
    %212 = math.exp %211 : vector<4x32xf32>
    %cst_33 = arith.constant 1.000000e+00 : f32
    %213 = vector.broadcast %cst_33 : f32 to vector<4x32xf32>
    %214 = arith.addf %213, %212 : vector<4x32xf32>
    %215 = arith.divf %213, %214 : vector<4x32xf32>
    %216 = arith.mulf %207, %162 : vector<4x32xf32>
    %217 = arith.mulf %201, %209 : vector<4x32xf32>
    %218 = arith.addf %216, %217 : vector<4x32xf32>
    %219 = math.tanh %218 : vector<4x32xf32>
    %220 = arith.mulf %215, %219 : vector<4x32xf32>
    %221 = vector.extract_strided_slice %194 {offsets = [0, 128], sizes = [4, 128], strides = [1, 1]} : vector<4x256xf32> to vector<4x128xf32>
    %222 = vector.extract_strided_slice %221 {offsets = [0, 0], sizes = [4, 32], strides = [1, 1]} : vector<4x128xf32> to vector<4x32xf32>
    %223 = arith.negf %222 : vector<4x32xf32>
    %224 = math.exp %223 : vector<4x32xf32>
    %cst_34 = arith.constant 1.000000e+00 : f32
    %225 = vector.broadcast %cst_34 : f32 to vector<4x32xf32>
    %226 = arith.addf %225, %224 : vector<4x32xf32>
    %227 = arith.divf %225, %226 : vector<4x32xf32>
    %228 = vector.extract_strided_slice %221 {offsets = [0, 32], sizes = [4, 32], strides = [1, 1]} : vector<4x128xf32> to vector<4x32xf32>
    %229 = arith.negf %228 : vector<4x32xf32>
    %230 = math.exp %229 : vector<4x32xf32>
    %cst_35 = arith.constant 1.000000e+00 : f32
    %231 = vector.broadcast %cst_35 : f32 to vector<4x32xf32>
    %232 = arith.addf %231, %230 : vector<4x32xf32>
    %233 = arith.divf %231, %232 : vector<4x32xf32>
    %234 = vector.extract_strided_slice %221 {offsets = [0, 64], sizes = [4, 32], strides = [1, 1]} : vector<4x128xf32> to vector<4x32xf32>
    %235 = math.tanh %234 : vector<4x32xf32>
    %236 = vector.extract_strided_slice %221 {offsets = [0, 96], sizes = [4, 32], strides = [1, 1]} : vector<4x128xf32> to vector<4x32xf32>
    %237 = arith.negf %236 : vector<4x32xf32>
    %238 = math.exp %237 : vector<4x32xf32>
    %cst_36 = arith.constant 1.000000e+00 : f32
    %239 = vector.broadcast %cst_36 : f32 to vector<4x32xf32>
    %240 = arith.addf %239, %238 : vector<4x32xf32>
    %241 = arith.divf %239, %240 : vector<4x32xf32>
    %242 = arith.mulf %233, %188 : vector<4x32xf32>
    %243 = arith.mulf %227, %235 : vector<4x32xf32>
    %244 = arith.addf %242, %243 : vector<4x32xf32>
    %245 = math.tanh %244 : vector<4x32xf32>
    %246 = arith.mulf %241, %245 : vector<4x32xf32>
    %247 = tpu.concatenate %10, %8, %220, %246 in 1 : vector<4x8xf32>, vector<4x8xf32>, vector<4x32xf32>, vector<4x32xf32> -> vector<4x80xf32>
    %cst_37 = arith.constant dense<0.000000e+00> : vector<4x256xf32>
    %248 = tpu.matmul %247, %17, %cst_37 {dimension_numbers = #tpu.dot_dimension_numbers<[1], [0], [0], [1], [0, 0, 1, 1], [], []>} : vector<4x80xf32>, vector<80x256xf32>, vector<4x256xf32> -> vector<4x256xf32>
    %249 = vector.broadcast %18 : vector<1x256xf32> to vector<4x256xf32>
    %250 = arith.addf %248, %249 : vector<4x256xf32>
    %251 = vector.extract_strided_slice %250 {offsets = [0, 0], sizes = [4, 128], strides = [1, 1]} : vector<4x256xf32> to vector<4x128xf32>
    %252 = vector.extract_strided_slice %251 {offsets = [0, 0], sizes = [4, 32], strides = [1, 1]} : vector<4x128xf32> to vector<4x32xf32>
    %253 = arith.negf %252 : vector<4x32xf32>
    %254 = math.exp %253 : vector<4x32xf32>
    %cst_38 = arith.constant 1.000000e+00 : f32
    %255 = vector.broadcast %cst_38 : f32 to vector<4x32xf32>
    %256 = arith.addf %255, %254 : vector<4x32xf32>
    %257 = arith.divf %255, %256 : vector<4x32xf32>
    %258 = vector.extract_strided_slice %251 {offsets = [0, 32], sizes = [4, 32], strides = [1, 1]} : vector<4x128xf32> to vector<4x32xf32>
    %259 = arith.negf %258 : vector<4x32xf32>
    %260 = math.exp %259 : vector<4x32xf32>
    %cst_39 = arith.constant 1.000000e+00 : f32
    %261 = vector.broadcast %cst_39 : f32 to vector<4x32xf32>
    %262 = arith.addf %261, %260 : vector<4x32xf32>
    %263 = arith.divf %261, %262 : vector<4x32xf32>
    %264 = vector.extract_strided_slice %251 {offsets = [0, 64], sizes = [4, 32], strides = [1, 1]} : vector<4x128xf32> to vector<4x32xf32>
    %265 = math.tanh %264 : vector<4x32xf32>
    %266 = vector.extract_strided_slice %251 {offsets = [0, 96], sizes = [4, 32], strides = [1, 1]} : vector<4x128xf32> to vector<4x32xf32>
    %267 = arith.negf %266 : vector<4x32xf32>
    %268 = math.exp %267 : vector<4x32xf32>
    %cst_40 = arith.constant 1.000000e+00 : f32
    %269 = vector.broadcast %cst_40 : f32 to vector<4x32xf32>
    %270 = arith.addf %269, %268 : vector<4x32xf32>
    %271 = arith.divf %269, %270 : vector<4x32xf32>
    %272 = arith.mulf %263, %218 : vector<4x32xf32>
    %273 = arith.mulf %257, %265 : vector<4x32xf32>
    %274 = arith.addf %272, %273 : vector<4x32xf32>
    %275 = math.tanh %274 : vector<4x32xf32>
    %276 = arith.mulf %271, %275 : vector<4x32xf32>
    %277 = vector.extract_strided_slice %250 {offsets = [0, 128], sizes = [4, 128], strides = [1, 1]} : vector<4x256xf32> to vector<4x128xf32>
    %278 = vector.extract_strided_slice %277 {offsets = [0, 0], sizes = [4, 32], strides = [1, 1]} : vector<4x128xf32> to vector<4x32xf32>
    %279 = arith.negf %278 : vector<4x32xf32>
    %280 = math.exp %279 : vector<4x32xf32>
    %cst_41 = arith.constant 1.000000e+00 : f32
    %281 = vector.broadcast %cst_41 : f32 to vector<4x32xf32>
    %282 = arith.addf %281, %280 : vector<4x32xf32>
    %283 = arith.divf %281, %282 : vector<4x32xf32>
    %284 = vector.extract_strided_slice %277 {offsets = [0, 32], sizes = [4, 32], strides = [1, 1]} : vector<4x128xf32> to vector<4x32xf32>
    %285 = arith.negf %284 : vector<4x32xf32>
    %286 = math.exp %285 : vector<4x32xf32>
    %cst_42 = arith.constant 1.000000e+00 : f32
    %287 = vector.broadcast %cst_42 : f32 to vector<4x32xf32>
    %288 = arith.addf %287, %286 : vector<4x32xf32>
    %289 = arith.divf %287, %288 : vector<4x32xf32>
    %290 = vector.extract_strided_slice %277 {offsets = [0, 64], sizes = [4, 32], strides = [1, 1]} : vector<4x128xf32> to vector<4x32xf32>
    %291 = math.tanh %290 : vector<4x32xf32>
    %292 = vector.extract_strided_slice %277 {offsets = [0, 96], sizes = [4, 32], strides = [1, 1]} : vector<4x128xf32> to vector<4x32xf32>
    %293 = arith.negf %292 : vector<4x32xf32>
    %294 = math.exp %293 : vector<4x32xf32>
    %cst_43 = arith.constant 1.000000e+00 : f32
    %295 = vector.broadcast %cst_43 : f32 to vector<4x32xf32>
    %296 = arith.addf %295, %294 : vector<4x32xf32>
    %297 = arith.divf %295, %296 : vector<4x32xf32>
    %298 = arith.mulf %289, %244 : vector<4x32xf32>
    %299 = arith.mulf %283, %291 : vector<4x32xf32>
    %300 = arith.addf %298, %299 : vector<4x32xf32>
    %301 = math.tanh %300 : vector<4x32xf32>
    %302 = arith.mulf %297, %301 : vector<4x32xf32>
    %303 = tpu.concatenate %12, %6, %276, %302 in 1 : vector<4x8xf32>, vector<4x8xf32>, vector<4x32xf32>, vector<4x32xf32> -> vector<4x80xf32>
    %cst_44 = arith.constant dense<0.000000e+00> : vector<4x256xf32>
    %304 = tpu.matmul %303, %17, %cst_44 {dimension_numbers = #tpu.dot_dimension_numbers<[1], [0], [0], [1], [0, 0, 1, 1], [], []>} : vector<4x80xf32>, vector<80x256xf32>, vector<4x256xf32> -> vector<4x256xf32>
    %305 = vector.broadcast %18 : vector<1x256xf32> to vector<4x256xf32>
    %306 = arith.addf %304, %305 : vector<4x256xf32>
    %307 = vector.extract_strided_slice %306 {offsets = [0, 0], sizes = [4, 128], strides = [1, 1]} : vector<4x256xf32> to vector<4x128xf32>
    %308 = vector.extract_strided_slice %307 {offsets = [0, 0], sizes = [4, 32], strides = [1, 1]} : vector<4x128xf32> to vector<4x32xf32>
    %309 = arith.negf %308 : vector<4x32xf32>
    %310 = math.exp %309 : vector<4x32xf32>
    %cst_45 = arith.constant 1.000000e+00 : f32
    %311 = vector.broadcast %cst_45 : f32 to vector<4x32xf32>
    %312 = arith.addf %311, %310 : vector<4x32xf32>
    %313 = arith.divf %311, %312 : vector<4x32xf32>
    %314 = vector.extract_strided_slice %307 {offsets = [0, 32], sizes = [4, 32], strides = [1, 1]} : vector<4x128xf32> to vector<4x32xf32>
    %315 = arith.negf %314 : vector<4x32xf32>
    %316 = math.exp %315 : vector<4x32xf32>
    %cst_46 = arith.constant 1.000000e+00 : f32
    %317 = vector.broadcast %cst_46 : f32 to vector<4x32xf32>
    %318 = arith.addf %317, %316 : vector<4x32xf32>
    %319 = arith.divf %317, %318 : vector<4x32xf32>
    %320 = vector.extract_strided_slice %307 {offsets = [0, 64], sizes = [4, 32], strides = [1, 1]} : vector<4x128xf32> to vector<4x32xf32>
    %321 = math.tanh %320 : vector<4x32xf32>
    %322 = vector.extract_strided_slice %307 {offsets = [0, 96], sizes = [4, 32], strides = [1, 1]} : vector<4x128xf32> to vector<4x32xf32>
    %323 = arith.negf %322 : vector<4x32xf32>
    %324 = math.exp %323 : vector<4x32xf32>
    %cst_47 = arith.constant 1.000000e+00 : f32
    %325 = vector.broadcast %cst_47 : f32 to vector<4x32xf32>
    %326 = arith.addf %325, %324 : vector<4x32xf32>
    %327 = arith.divf %325, %326 : vector<4x32xf32>
    %328 = arith.mulf %319, %274 : vector<4x32xf32>
    %329 = arith.mulf %313, %321 : vector<4x32xf32>
    %330 = arith.addf %328, %329 : vector<4x32xf32>
    %331 = math.tanh %330 : vector<4x32xf32>
    %332 = arith.mulf %327, %331 : vector<4x32xf32>
    %333 = vector.extract_strided_slice %306 {offsets = [0, 128], sizes = [4, 128], strides = [1, 1]} : vector<4x256xf32> to vector<4x128xf32>
    %334 = vector.extract_strided_slice %333 {offsets = [0, 0], sizes = [4, 32], strides = [1, 1]} : vector<4x128xf32> to vector<4x32xf32>
    %335 = arith.negf %334 : vector<4x32xf32>
    %336 = math.exp %335 : vector<4x32xf32>
    %cst_48 = arith.constant 1.000000e+00 : f32
    %337 = vector.broadcast %cst_48 : f32 to vector<4x32xf32>
    %338 = arith.addf %337, %336 : vector<4x32xf32>
    %339 = arith.divf %337, %338 : vector<4x32xf32>
    %340 = vector.extract_strided_slice %333 {offsets = [0, 32], sizes = [4, 32], strides = [1, 1]} : vector<4x128xf32> to vector<4x32xf32>
    %341 = arith.negf %340 : vector<4x32xf32>
    %342 = math.exp %341 : vector<4x32xf32>
    %cst_49 = arith.constant 1.000000e+00 : f32
    %343 = vector.broadcast %cst_49 : f32 to vector<4x32xf32>
    %344 = arith.addf %343, %342 : vector<4x32xf32>
    %345 = arith.divf %343, %344 : vector<4x32xf32>
    %346 = vector.extract_strided_slice %333 {offsets = [0, 64], sizes = [4, 32], strides = [1, 1]} : vector<4x128xf32> to vector<4x32xf32>
    %347 = math.tanh %346 : vector<4x32xf32>
    %348 = vector.extract_strided_slice %333 {offsets = [0, 96], sizes = [4, 32], strides = [1, 1]} : vector<4x128xf32> to vector<4x32xf32>
    %349 = arith.negf %348 : vector<4x32xf32>
    %350 = math.exp %349 : vector<4x32xf32>
    %cst_50 = arith.constant 1.000000e+00 : f32
    %351 = vector.broadcast %cst_50 : f32 to vector<4x32xf32>
    %352 = arith.addf %351, %350 : vector<4x32xf32>
    %353 = arith.divf %351, %352 : vector<4x32xf32>
    %354 = arith.mulf %345, %300 : vector<4x32xf32>
    %355 = arith.mulf %339, %347 : vector<4x32xf32>
    %356 = arith.addf %354, %355 : vector<4x32xf32>
    %357 = math.tanh %356 : vector<4x32xf32>
    %358 = arith.mulf %353, %357 : vector<4x32xf32>
    %359 = tpu.concatenate %14, %4, %332, %358 in 1 : vector<4x8xf32>, vector<4x8xf32>, vector<4x32xf32>, vector<4x32xf32> -> vector<4x80xf32>
    %cst_51 = arith.constant dense<0.000000e+00> : vector<4x256xf32>
    %360 = tpu.matmul %359, %17, %cst_51 {dimension_numbers = #tpu.dot_dimension_numbers<[1], [0], [0], [1], [0, 0, 1, 1], [], []>} : vector<4x80xf32>, vector<80x256xf32>, vector<4x256xf32> -> vector<4x256xf32>
    %361 = vector.broadcast %18 : vector<1x256xf32> to vector<4x256xf32>
    %362 = arith.addf %360, %361 : vector<4x256xf32>
    %363 = vector.extract_strided_slice %362 {offsets = [0, 0], sizes = [4, 128], strides = [1, 1]} : vector<4x256xf32> to vector<4x128xf32>
    %364 = vector.extract_strided_slice %363 {offsets = [0, 0], sizes = [4, 32], strides = [1, 1]} : vector<4x128xf32> to vector<4x32xf32>
    %365 = arith.negf %364 : vector<4x32xf32>
    %366 = math.exp %365 : vector<4x32xf32>
    %cst_52 = arith.constant 1.000000e+00 : f32
    %367 = vector.broadcast %cst_52 : f32 to vector<4x32xf32>
    %368 = arith.addf %367, %366 : vector<4x32xf32>
    %369 = arith.divf %367, %368 : vector<4x32xf32>
    %370 = vector.extract_strided_slice %363 {offsets = [0, 32], sizes = [4, 32], strides = [1, 1]} : vector<4x128xf32> to vector<4x32xf32>
    %371 = arith.negf %370 : vector<4x32xf32>
    %372 = math.exp %371 : vector<4x32xf32>
    %cst_53 = arith.constant 1.000000e+00 : f32
    %373 = vector.broadcast %cst_53 : f32 to vector<4x32xf32>
    %374 = arith.addf %373, %372 : vector<4x32xf32>
    %375 = arith.divf %373, %374 : vector<4x32xf32>
    %376 = vector.extract_strided_slice %363 {offsets = [0, 64], sizes = [4, 32], strides = [1, 1]} : vector<4x128xf32> to vector<4x32xf32>
    %377 = math.tanh %376 : vector<4x32xf32>
    %378 = vector.extract_strided_slice %363 {offsets = [0, 96], sizes = [4, 32], strides = [1, 1]} : vector<4x128xf32> to vector<4x32xf32>
    %379 = arith.negf %378 : vector<4x32xf32>
    %380 = math.exp %379 : vector<4x32xf32>
    %cst_54 = arith.constant 1.000000e+00 : f32
    %381 = vector.broadcast %cst_54 : f32 to vector<4x32xf32>
    %382 = arith.addf %381, %380 : vector<4x32xf32>
    %383 = arith.divf %381, %382 : vector<4x32xf32>
    %384 = arith.mulf %375, %330 : vector<4x32xf32>
    %385 = arith.mulf %369, %377 : vector<4x32xf32>
    %386 = arith.addf %384, %385 : vector<4x32xf32>
    %387 = math.tanh %386 : vector<4x32xf32>
    %388 = arith.mulf %383, %387 : vector<4x32xf32>
    %389 = vector.extract_strided_slice %362 {offsets = [0, 128], sizes = [4, 128], strides = [1, 1]} : vector<4x256xf32> to vector<4x128xf32>
    %390 = vector.extract_strided_slice %389 {offsets = [0, 0], sizes = [4, 32], strides = [1, 1]} : vector<4x128xf32> to vector<4x32xf32>
    %391 = arith.negf %390 : vector<4x32xf32>
    %392 = math.exp %391 : vector<4x32xf32>
    %cst_55 = arith.constant 1.000000e+00 : f32
    %393 = vector.broadcast %cst_55 : f32 to vector<4x32xf32>
    %394 = arith.addf %393, %392 : vector<4x32xf32>
    %395 = arith.divf %393, %394 : vector<4x32xf32>
    %396 = vector.extract_strided_slice %389 {offsets = [0, 32], sizes = [4, 32], strides = [1, 1]} : vector<4x128xf32> to vector<4x32xf32>
    %397 = arith.negf %396 : vector<4x32xf32>
    %398 = math.exp %397 : vector<4x32xf32>
    %cst_56 = arith.constant 1.000000e+00 : f32
    %399 = vector.broadcast %cst_56 : f32 to vector<4x32xf32>
    %400 = arith.addf %399, %398 : vector<4x32xf32>
    %401 = arith.divf %399, %400 : vector<4x32xf32>
    %402 = vector.extract_strided_slice %389 {offsets = [0, 64], sizes = [4, 32], strides = [1, 1]} : vector<4x128xf32> to vector<4x32xf32>
    %403 = math.tanh %402 : vector<4x32xf32>
    %404 = vector.extract_strided_slice %389 {offsets = [0, 96], sizes = [4, 32], strides = [1, 1]} : vector<4x128xf32> to vector<4x32xf32>
    %405 = arith.negf %404 : vector<4x32xf32>
    %406 = math.exp %405 : vector<4x32xf32>
    %cst_57 = arith.constant 1.000000e+00 : f32
    %407 = vector.broadcast %cst_57 : f32 to vector<4x32xf32>
    %408 = arith.addf %407, %406 : vector<4x32xf32>
    %409 = arith.divf %407, %408 : vector<4x32xf32>
    %410 = arith.mulf %401, %356 : vector<4x32xf32>
    %411 = arith.mulf %395, %403 : vector<4x32xf32>
    %412 = arith.addf %410, %411 : vector<4x32xf32>
    %413 = math.tanh %412 : vector<4x32xf32>
    %414 = arith.mulf %409, %413 : vector<4x32xf32>
    %415 = tpu.concatenate %16, %2, %388, %414 in 1 : vector<4x8xf32>, vector<4x8xf32>, vector<4x32xf32>, vector<4x32xf32> -> vector<4x80xf32>
    %cst_58 = arith.constant dense<0.000000e+00> : vector<4x256xf32>
    %416 = tpu.matmul %415, %17, %cst_58 {dimension_numbers = #tpu.dot_dimension_numbers<[1], [0], [0], [1], [0, 0, 1, 1], [], []>} : vector<4x80xf32>, vector<80x256xf32>, vector<4x256xf32> -> vector<4x256xf32>
    %417 = vector.broadcast %18 : vector<1x256xf32> to vector<4x256xf32>
    %418 = arith.addf %416, %417 : vector<4x256xf32>
    %419 = vector.extract_strided_slice %418 {offsets = [0, 0], sizes = [4, 128], strides = [1, 1]} : vector<4x256xf32> to vector<4x128xf32>
    %420 = vector.extract_strided_slice %419 {offsets = [0, 0], sizes = [4, 32], strides = [1, 1]} : vector<4x128xf32> to vector<4x32xf32>
    %421 = arith.negf %420 : vector<4x32xf32>
    %422 = math.exp %421 : vector<4x32xf32>
    %cst_59 = arith.constant 1.000000e+00 : f32
    %423 = vector.broadcast %cst_59 : f32 to vector<4x32xf32>
    %424 = arith.addf %423, %422 : vector<4x32xf32>
    %425 = arith.divf %423, %424 : vector<4x32xf32>
    %426 = vector.extract_strided_slice %419 {offsets = [0, 32], sizes = [4, 32], strides = [1, 1]} : vector<4x128xf32> to vector<4x32xf32>
    %427 = arith.negf %426 : vector<4x32xf32>
    %428 = math.exp %427 : vector<4x32xf32>
    %cst_60 = arith.constant 1.000000e+00 : f32
    %429 = vector.broadcast %cst_60 : f32 to vector<4x32xf32>
    %430 = arith.addf %429, %428 : vector<4x32xf32>
    %431 = arith.divf %429, %430 : vector<4x32xf32>
    %432 = vector.extract_strided_slice %419 {offsets = [0, 64], sizes = [4, 32], strides = [1, 1]} : vector<4x128xf32> to vector<4x32xf32>
    %433 = math.tanh %432 : vector<4x32xf32>
    %434 = vector.extract_strided_slice %419 {offsets = [0, 96], sizes = [4, 32], strides = [1, 1]} : vector<4x128xf32> to vector<4x32xf32>
    %435 = arith.negf %434 : vector<4x32xf32>
    %436 = math.exp %435 : vector<4x32xf32>
    %cst_61 = arith.constant 1.000000e+00 : f32
    %437 = vector.broadcast %cst_61 : f32 to vector<4x32xf32>
    %438 = arith.addf %437, %436 : vector<4x32xf32>
    %439 = arith.divf %437, %438 : vector<4x32xf32>
    %440 = arith.mulf %431, %386 : vector<4x32xf32>
    %441 = arith.mulf %425, %433 : vector<4x32xf32>
    %442 = arith.addf %440, %441 : vector<4x32xf32>
    %443 = math.tanh %442 : vector<4x32xf32>
    %444 = arith.mulf %439, %443 : vector<4x32xf32>
    %445 = vector.extract_strided_slice %418 {offsets = [0, 128], sizes = [4, 128], strides = [1, 1]} : vector<4x256xf32> to vector<4x128xf32>
    %446 = vector.extract_strided_slice %445 {offsets = [0, 0], sizes = [4, 32], strides = [1, 1]} : vector<4x128xf32> to vector<4x32xf32>
    %447 = arith.negf %446 : vector<4x32xf32>
    %448 = math.exp %447 : vector<4x32xf32>
    %cst_62 = arith.constant 1.000000e+00 : f32
    %449 = vector.broadcast %cst_62 : f32 to vector<4x32xf32>
    %450 = arith.addf %449, %448 : vector<4x32xf32>
    %451 = arith.divf %449, %450 : vector<4x32xf32>
    %452 = vector.extract_strided_slice %445 {offsets = [0, 32], sizes = [4, 32], strides = [1, 1]} : vector<4x128xf32> to vector<4x32xf32>
    %453 = arith.negf %452 : vector<4x32xf32>
    %454 = math.exp %453 : vector<4x32xf32>
    %cst_63 = arith.constant 1.000000e+00 : f32
    %455 = vector.broadcast %cst_63 : f32 to vector<4x32xf32>
    %456 = arith.addf %455, %454 : vector<4x32xf32>
    %457 = arith.divf %455, %456 : vector<4x32xf32>
    %458 = vector.extract_strided_slice %445 {offsets = [0, 64], sizes = [4, 32], strides = [1, 1]} : vector<4x128xf32> to vector<4x32xf32>
    %459 = math.tanh %458 : vector<4x32xf32>
    %460 = vector.extract_strided_slice %445 {offsets = [0, 96], sizes = [4, 32], strides = [1, 1]} : vector<4x128xf32> to vector<4x32xf32>
    %461 = arith.negf %460 : vector<4x32xf32>
    %462 = math.exp %461 : vector<4x32xf32>
    %cst_64 = arith.constant 1.000000e+00 : f32
    %463 = vector.broadcast %cst_64 : f32 to vector<4x32xf32>
    %464 = arith.addf %463, %462 : vector<4x32xf32>
    %465 = arith.divf %463, %464 : vector<4x32xf32>
    %466 = arith.mulf %457, %412 : vector<4x32xf32>
    %467 = arith.mulf %451, %459 : vector<4x32xf32>
    %468 = arith.addf %466, %467 : vector<4x32xf32>
    %469 = math.tanh %468 : vector<4x32xf32>
    %470 = arith.mulf %465, %469 : vector<4x32xf32>
    %471 = arith.addf %52, %470 : vector<4x32xf32>
    %472 = arith.addf %108, %414 : vector<4x32xf32>
    %473 = arith.addf %164, %358 : vector<4x32xf32>
    %474 = arith.addf %220, %302 : vector<4x32xf32>
    %475 = arith.addf %276, %246 : vector<4x32xf32>
    %476 = arith.addf %332, %190 : vector<4x32xf32>
    %477 = arith.addf %388, %134 : vector<4x32xf32>
    %478 = arith.addf %444, %78 : vector<4x32xf32>
    %c0_65 = arith.constant 0 : index
    %c0_66 = arith.constant 0 : index
    %479 = vector.load %arg4[%c0_65, %c0_66] : memref<32x32xf32, #tpu.memory_space<vmem>>, vector<32x32xf32>
    %c0_67 = arith.constant 0 : index
    %c0_68 = arith.constant 0 : index
    %480 = vector.load %arg5[%c0_67, %c0_68] : memref<1x32xf32, #tpu.memory_space<vmem>>, vector<1x32xf32>
    %cst_69 = arith.constant dense<0.000000e+00> : vector<4x32xf32>
    %481 = tpu.matmul %471, %479, %cst_69 {dimension_numbers = #tpu.dot_dimension_numbers<[1], [0], [0], [1], [0, 0, 1, 1], [], []>} : vector<4x32xf32>, vector<32x32xf32>, vector<4x32xf32> -> vector<4x32xf32>
    %482 = vector.broadcast %480 : vector<1x32xf32> to vector<4x32xf32>
    %483 = arith.addf %481, %482 : vector<4x32xf32>
    %cst_70 = arith.constant dense<0.000000e+00> : vector<4x32xf32>
    %484 = tpu.matmul %472, %479, %cst_70 {dimension_numbers = #tpu.dot_dimension_numbers<[1], [0], [0], [1], [0, 0, 1, 1], [], []>} : vector<4x32xf32>, vector<32x32xf32>, vector<4x32xf32> -> vector<4x32xf32>
    %485 = vector.broadcast %480 : vector<1x32xf32> to vector<4x32xf32>
    %486 = arith.addf %484, %485 : vector<4x32xf32>
    %cst_71 = arith.constant dense<0.000000e+00> : vector<4x32xf32>
    %487 = tpu.matmul %473, %479, %cst_71 {dimension_numbers = #tpu.dot_dimension_numbers<[1], [0], [0], [1], [0, 0, 1, 1], [], []>} : vector<4x32xf32>, vector<32x32xf32>, vector<4x32xf32> -> vector<4x32xf32>
    %488 = vector.broadcast %480 : vector<1x32xf32> to vector<4x32xf32>
    %489 = arith.addf %487, %488 : vector<4x32xf32>
    %cst_72 = arith.constant dense<0.000000e+00> : vector<4x32xf32>
    %490 = tpu.matmul %474, %479, %cst_72 {dimension_numbers = #tpu.dot_dimension_numbers<[1], [0], [0], [1], [0, 0, 1, 1], [], []>} : vector<4x32xf32>, vector<32x32xf32>, vector<4x32xf32> -> vector<4x32xf32>
    %491 = vector.broadcast %480 : vector<1x32xf32> to vector<4x32xf32>
    %492 = arith.addf %490, %491 : vector<4x32xf32>
    %cst_73 = arith.constant dense<0.000000e+00> : vector<4x32xf32>
    %493 = tpu.matmul %475, %479, %cst_73 {dimension_numbers = #tpu.dot_dimension_numbers<[1], [0], [0], [1], [0, 0, 1, 1], [], []>} : vector<4x32xf32>, vector<32x32xf32>, vector<4x32xf32> -> vector<4x32xf32>
    %494 = vector.broadcast %480 : vector<1x32xf32> to vector<4x32xf32>
    %495 = arith.addf %493, %494 : vector<4x32xf32>
    %cst_74 = arith.constant dense<0.000000e+00> : vector<4x32xf32>
    %496 = tpu.matmul %476, %479, %cst_74 {dimension_numbers = #tpu.dot_dimension_numbers<[1], [0], [0], [1], [0, 0, 1, 1], [], []>} : vector<4x32xf32>, vector<32x32xf32>, vector<4x32xf32> -> vector<4x32xf32>
    %497 = vector.broadcast %480 : vector<1x32xf32> to vector<4x32xf32>
    %498 = arith.addf %496, %497 : vector<4x32xf32>
    %cst_75 = arith.constant dense<0.000000e+00> : vector<4x32xf32>
    %499 = tpu.matmul %477, %479, %cst_75 {dimension_numbers = #tpu.dot_dimension_numbers<[1], [0], [0], [1], [0, 0, 1, 1], [], []>} : vector<4x32xf32>, vector<32x32xf32>, vector<4x32xf32> -> vector<4x32xf32>
    %500 = vector.broadcast %480 : vector<1x32xf32> to vector<4x32xf32>
    %501 = arith.addf %499, %500 : vector<4x32xf32>
    %cst_76 = arith.constant dense<0.000000e+00> : vector<4x32xf32>
    %502 = tpu.matmul %478, %479, %cst_76 {dimension_numbers = #tpu.dot_dimension_numbers<[1], [0], [0], [1], [0, 0, 1, 1], [], []>} : vector<4x32xf32>, vector<32x32xf32>, vector<4x32xf32> -> vector<4x32xf32>
    %503 = vector.broadcast %480 : vector<1x32xf32> to vector<4x32xf32>
    %504 = arith.addf %502, %503 : vector<4x32xf32>
    %c0_77 = arith.constant 0 : index
    %c0_78 = arith.constant 0 : index
    %505 = vector.load %arg6[%c0_77, %c0_78] : memref<32x32xf32, #tpu.memory_space<vmem>>, vector<32x32xf32>
    %cst_79 = arith.constant dense<0.000000e+00> : vector<4x32xf32>
    %506 = tpu.matmul %504, %505, %cst_79 {dimension_numbers = #tpu.dot_dimension_numbers<[1], [0], [0], [1], [0, 0, 1, 1], [], []>} : vector<4x32xf32>, vector<32x32xf32>, vector<4x32xf32> -> vector<4x32xf32>
    %c0_80 = arith.constant 0 : index
    %c0_81 = arith.constant 0 : index
    %507 = vector.load %arg7[%c0_80, %c0_81] : memref<1x1xf32, #tpu.memory_space<vmem>>, vector<1x1xf32>
    %508 = arith.mulf %483, %506 : vector<4x32xf32>
    %cst_82 = arith.constant dense<0.000000e+00> : vector<4xf32>
    %509 = vector.multi_reduction <add>, %508, %cst_82 [1] : vector<4x32xf32> to vector<4xf32>
    %510 = vector.shape_cast %509 : vector<4xf32> to vector<4x1xf32>
    %511 = vector.broadcast %507 : vector<1x1xf32> to vector<4x1xf32>
    %512 = arith.addf %510, %511 : vector<4x1xf32>
    %513 = arith.mulf %486, %506 : vector<4x32xf32>
    %cst_83 = arith.constant dense<0.000000e+00> : vector<4xf32>
    %514 = vector.multi_reduction <add>, %513, %cst_83 [1] : vector<4x32xf32> to vector<4xf32>
    %515 = vector.shape_cast %514 : vector<4xf32> to vector<4x1xf32>
    %516 = vector.broadcast %507 : vector<1x1xf32> to vector<4x1xf32>
    %517 = arith.addf %515, %516 : vector<4x1xf32>
    %518 = arith.mulf %489, %506 : vector<4x32xf32>
    %cst_84 = arith.constant dense<0.000000e+00> : vector<4xf32>
    %519 = vector.multi_reduction <add>, %518, %cst_84 [1] : vector<4x32xf32> to vector<4xf32>
    %520 = vector.shape_cast %519 : vector<4xf32> to vector<4x1xf32>
    %521 = vector.broadcast %507 : vector<1x1xf32> to vector<4x1xf32>
    %522 = arith.addf %520, %521 : vector<4x1xf32>
    %523 = arith.mulf %492, %506 : vector<4x32xf32>
    %cst_85 = arith.constant dense<0.000000e+00> : vector<4xf32>
    %524 = vector.multi_reduction <add>, %523, %cst_85 [1] : vector<4x32xf32> to vector<4xf32>
    %525 = vector.shape_cast %524 : vector<4xf32> to vector<4x1xf32>
    %526 = vector.broadcast %507 : vector<1x1xf32> to vector<4x1xf32>
    %527 = arith.addf %525, %526 : vector<4x1xf32>
    %528 = arith.mulf %495, %506 : vector<4x32xf32>
    %cst_86 = arith.constant dense<0.000000e+00> : vector<4xf32>
    %529 = vector.multi_reduction <add>, %528, %cst_86 [1] : vector<4x32xf32> to vector<4xf32>
    %530 = vector.shape_cast %529 : vector<4xf32> to vector<4x1xf32>
    %531 = vector.broadcast %507 : vector<1x1xf32> to vector<4x1xf32>
    %532 = arith.addf %530, %531 : vector<4x1xf32>
    %533 = arith.mulf %498, %506 : vector<4x32xf32>
    %cst_87 = arith.constant dense<0.000000e+00> : vector<4xf32>
    %534 = vector.multi_reduction <add>, %533, %cst_87 [1] : vector<4x32xf32> to vector<4xf32>
    %535 = vector.shape_cast %534 : vector<4xf32> to vector<4x1xf32>
    %536 = vector.broadcast %507 : vector<1x1xf32> to vector<4x1xf32>
    %537 = arith.addf %535, %536 : vector<4x1xf32>
    %538 = arith.mulf %501, %506 : vector<4x32xf32>
    %cst_88 = arith.constant dense<0.000000e+00> : vector<4xf32>
    %539 = vector.multi_reduction <add>, %538, %cst_88 [1] : vector<4x32xf32> to vector<4xf32>
    %540 = vector.shape_cast %539 : vector<4xf32> to vector<4x1xf32>
    %541 = vector.broadcast %507 : vector<1x1xf32> to vector<4x1xf32>
    %542 = arith.addf %540, %541 : vector<4x1xf32>
    %543 = arith.mulf %504, %506 : vector<4x32xf32>
    %cst_89 = arith.constant dense<0.000000e+00> : vector<4xf32>
    %544 = vector.multi_reduction <add>, %543, %cst_89 [1] : vector<4x32xf32> to vector<4xf32>
    %545 = vector.shape_cast %544 : vector<4xf32> to vector<4x1xf32>
    %546 = vector.broadcast %507 : vector<1x1xf32> to vector<4x1xf32>
    %547 = arith.addf %545, %546 : vector<4x1xf32>
    %548 = arith.maximumf %512, %517 : vector<4x1xf32>
    %549 = arith.maximumf %548, %522 : vector<4x1xf32>
    %550 = arith.maximumf %549, %527 : vector<4x1xf32>
    %551 = arith.maximumf %550, %532 : vector<4x1xf32>
    %552 = arith.maximumf %551, %537 : vector<4x1xf32>
    %553 = arith.maximumf %552, %542 : vector<4x1xf32>
    %554 = arith.maximumf %553, %547 : vector<4x1xf32>
    %555 = arith.subf %512, %554 : vector<4x1xf32>
    %556 = math.exp %555 : vector<4x1xf32>
    %557 = arith.subf %517, %554 : vector<4x1xf32>
    %558 = math.exp %557 : vector<4x1xf32>
    %559 = arith.subf %522, %554 : vector<4x1xf32>
    %560 = math.exp %559 : vector<4x1xf32>
    %561 = arith.subf %527, %554 : vector<4x1xf32>
    %562 = math.exp %561 : vector<4x1xf32>
    %563 = arith.subf %532, %554 : vector<4x1xf32>
    %564 = math.exp %563 : vector<4x1xf32>
    %565 = arith.subf %537, %554 : vector<4x1xf32>
    %566 = math.exp %565 : vector<4x1xf32>
    %567 = arith.subf %542, %554 : vector<4x1xf32>
    %568 = math.exp %567 : vector<4x1xf32>
    %569 = arith.subf %547, %554 : vector<4x1xf32>
    %570 = math.exp %569 : vector<4x1xf32>
    %571 = arith.addf %556, %558 : vector<4x1xf32>
    %572 = arith.addf %571, %560 : vector<4x1xf32>
    %573 = arith.addf %572, %562 : vector<4x1xf32>
    %574 = arith.addf %573, %564 : vector<4x1xf32>
    %575 = arith.addf %574, %566 : vector<4x1xf32>
    %576 = arith.addf %575, %568 : vector<4x1xf32>
    %577 = arith.addf %576, %570 : vector<4x1xf32>
    %cst_90 = arith.constant 1.000000e+00 : f32
    %578 = vector.broadcast %cst_90 : f32 to vector<4x1xf32>
    %579 = arith.divf %578, %577 : vector<4x1xf32>
    %580 = arith.mulf %556, %579 : vector<4x1xf32>
    %581 = vector.broadcast %580 : vector<4x1xf32> to vector<4x32xf32>
    %582 = arith.mulf %483, %581 : vector<4x32xf32>
    %583 = arith.mulf %558, %579 : vector<4x1xf32>
    %584 = vector.broadcast %583 : vector<4x1xf32> to vector<4x32xf32>
    %585 = arith.mulf %486, %584 : vector<4x32xf32>
    %586 = arith.addf %582, %585 : vector<4x32xf32>
    %587 = arith.mulf %560, %579 : vector<4x1xf32>
    %588 = vector.broadcast %587 : vector<4x1xf32> to vector<4x32xf32>
    %589 = arith.mulf %489, %588 : vector<4x32xf32>
    %590 = arith.addf %586, %589 : vector<4x32xf32>
    %591 = arith.mulf %562, %579 : vector<4x1xf32>
    %592 = vector.broadcast %591 : vector<4x1xf32> to vector<4x32xf32>
    %593 = arith.mulf %492, %592 : vector<4x32xf32>
    %594 = arith.addf %590, %593 : vector<4x32xf32>
    %595 = arith.mulf %564, %579 : vector<4x1xf32>
    %596 = vector.broadcast %595 : vector<4x1xf32> to vector<4x32xf32>
    %597 = arith.mulf %495, %596 : vector<4x32xf32>
    %598 = arith.addf %594, %597 : vector<4x32xf32>
    %599 = arith.mulf %566, %579 : vector<4x1xf32>
    %600 = vector.broadcast %599 : vector<4x1xf32> to vector<4x32xf32>
    %601 = arith.mulf %498, %600 : vector<4x32xf32>
    %602 = arith.addf %598, %601 : vector<4x32xf32>
    %603 = arith.mulf %568, %579 : vector<4x1xf32>
    %604 = vector.broadcast %603 : vector<4x1xf32> to vector<4x32xf32>
    %605 = arith.mulf %501, %604 : vector<4x32xf32>
    %606 = arith.addf %602, %605 : vector<4x32xf32>
    %607 = arith.mulf %570, %579 : vector<4x1xf32>
    %608 = vector.broadcast %607 : vector<4x1xf32> to vector<4x32xf32>
    %609 = arith.mulf %504, %608 : vector<4x32xf32>
    %610 = arith.addf %606, %609 : vector<4x32xf32>
    %611 = tpu.iota {dimensions = array<i32: 0>} : vector<4x4xi32>
    %612 = tpu.iota {dimensions = array<i32: 1>} : vector<4x4xi32>
    %cst_91 = arith.constant 0.000000e+00 : f32
    %613 = vector.broadcast %cst_91 : f32 to vector<4x4xf32>
    %c0_92 = arith.constant 0 : index
    %c0_93 = arith.constant 0 : index
    %614 = memref.load %arg1[%c0_92, %c0_93] : memref<2x5xi32, #tpu.memory_space<smem>>
    %c1 = arith.constant 1 : index
    %c0_94 = arith.constant 0 : index
    %615 = memref.load %arg1[%c1, %c0_94] : memref<2x5xi32, #tpu.memory_space<smem>>
    %616 = vector.broadcast %615 : i32 to vector<4x4xi32>
    %617 = arith.cmpi eq, %611, %616 : vector<4x4xi32>
    %618 = vector.broadcast %614 : i32 to vector<4x4xi32>
    %619 = arith.cmpi eq, %612, %618 : vector<4x4xi32>
    %620 = arith.andi %617, %619 : vector<4x4xi1>
    %cst_95 = arith.constant 1.000000e+00 : f32
    %cst_96 = arith.constant 0.000000e+00 : f32
    %621 = vector.broadcast %cst_95 : f32 to vector<4x4xf32>
    %622 = vector.broadcast %cst_96 : f32 to vector<4x4xf32>
    %623 = arith.select %620, %621, %622 : vector<4x4xi1>, vector<4x4xf32>
    %624 = arith.addf %613, %623 : vector<4x4xf32>
    %c0_97 = arith.constant 0 : index
    %c1_98 = arith.constant 1 : index
    %625 = memref.load %arg1[%c0_97, %c1_98] : memref<2x5xi32, #tpu.memory_space<smem>>
    %c1_99 = arith.constant 1 : index
    %c1_100 = arith.constant 1 : index
    %626 = memref.load %arg1[%c1_99, %c1_100] : memref<2x5xi32, #tpu.memory_space<smem>>
    %627 = vector.broadcast %626 : i32 to vector<4x4xi32>
    %628 = arith.cmpi eq, %611, %627 : vector<4x4xi32>
    %629 = vector.broadcast %625 : i32 to vector<4x4xi32>
    %630 = arith.cmpi eq, %612, %629 : vector<4x4xi32>
    %631 = arith.andi %628, %630 : vector<4x4xi1>
    %cst_101 = arith.constant 1.000000e+00 : f32
    %cst_102 = arith.constant 0.000000e+00 : f32
    %632 = vector.broadcast %cst_101 : f32 to vector<4x4xf32>
    %633 = vector.broadcast %cst_102 : f32 to vector<4x4xf32>
    %634 = arith.select %631, %632, %633 : vector<4x4xi1>, vector<4x4xf32>
    %635 = arith.addf %624, %634 : vector<4x4xf32>
    %c0_103 = arith.constant 0 : index
    %c2 = arith.constant 2 : index
    %636 = memref.load %arg1[%c0_103, %c2] : memref<2x5xi32, #tpu.memory_space<smem>>
    %c1_104 = arith.constant 1 : index
    %c2_105 = arith.constant 2 : index
    %637 = memref.load %arg1[%c1_104, %c2_105] : memref<2x5xi32, #tpu.memory_space<smem>>
    %638 = vector.broadcast %637 : i32 to vector<4x4xi32>
    %639 = arith.cmpi eq, %611, %638 : vector<4x4xi32>
    %640 = vector.broadcast %636 : i32 to vector<4x4xi32>
    %641 = arith.cmpi eq, %612, %640 : vector<4x4xi32>
    %642 = arith.andi %639, %641 : vector<4x4xi1>
    %cst_106 = arith.constant 1.000000e+00 : f32
    %cst_107 = arith.constant 0.000000e+00 : f32
    %643 = vector.broadcast %cst_106 : f32 to vector<4x4xf32>
    %644 = vector.broadcast %cst_107 : f32 to vector<4x4xf32>
    %645 = arith.select %642, %643, %644 : vector<4x4xi1>, vector<4x4xf32>
    %646 = arith.addf %635, %645 : vector<4x4xf32>
    %c0_108 = arith.constant 0 : index
    %c3 = arith.constant 3 : index
    %647 = memref.load %arg1[%c0_108, %c3] : memref<2x5xi32, #tpu.memory_space<smem>>
    %c1_109 = arith.constant 1 : index
    %c3_110 = arith.constant 3 : index
    %648 = memref.load %arg1[%c1_109, %c3_110] : memref<2x5xi32, #tpu.memory_space<smem>>
    %649 = vector.broadcast %648 : i32 to vector<4x4xi32>
    %650 = arith.cmpi eq, %611, %649 : vector<4x4xi32>
    %651 = vector.broadcast %647 : i32 to vector<4x4xi32>
    %652 = arith.cmpi eq, %612, %651 : vector<4x4xi32>
    %653 = arith.andi %650, %652 : vector<4x4xi1>
    %cst_111 = arith.constant 1.000000e+00 : f32
    %cst_112 = arith.constant 0.000000e+00 : f32
    %654 = vector.broadcast %cst_111 : f32 to vector<4x4xf32>
    %655 = vector.broadcast %cst_112 : f32 to vector<4x4xf32>
    %656 = arith.select %653, %654, %655 : vector<4x4xi1>, vector<4x4xf32>
    %657 = arith.addf %646, %656 : vector<4x4xf32>
    %c0_113 = arith.constant 0 : index
    %c4 = arith.constant 4 : index
    %658 = memref.load %arg1[%c0_113, %c4] : memref<2x5xi32, #tpu.memory_space<smem>>
    %c1_114 = arith.constant 1 : index
    %c4_115 = arith.constant 4 : index
    %659 = memref.load %arg1[%c1_114, %c4_115] : memref<2x5xi32, #tpu.memory_space<smem>>
    %660 = vector.broadcast %659 : i32 to vector<4x4xi32>
    %661 = arith.cmpi eq, %611, %660 : vector<4x4xi32>
    %662 = vector.broadcast %658 : i32 to vector<4x4xi32>
    %663 = arith.cmpi eq, %612, %662 : vector<4x4xi32>
    %664 = arith.andi %661, %663 : vector<4x4xi1>
    %cst_116 = arith.constant 1.000000e+00 : f32
    %cst_117 = arith.constant 0.000000e+00 : f32
    %665 = vector.broadcast %cst_116 : f32 to vector<4x4xf32>
    %666 = vector.broadcast %cst_117 : f32 to vector<4x4xf32>
    %667 = arith.select %664, %665, %666 : vector<4x4xi1>, vector<4x4xf32>
    %668 = arith.addf %657, %667 : vector<4x4xf32>
    %cst_118 = arith.constant dense<0.000000e+00> : vector<4x32xf32>
    %669 = tpu.matmul %668, %610, %cst_118 {dimension_numbers = #tpu.dot_dimension_numbers<[1], [0], [0], [1], [0, 0, 1, 1], [], []>} : vector<4x4xf32>, vector<4x32xf32>, vector<4x32xf32> -> vector<4x32xf32>
    %670 = arith.addf %610, %669 : vector<4x32xf32>
    %c0_119 = arith.constant 0 : index
    %c0_120 = arith.constant 0 : index
    %671 = vector.load %arg8[%c0_119, %c0_120] : memref<32x32xf32, #tpu.memory_space<vmem>>, vector<32x32xf32>
    %cst_121 = arith.constant dense<0.000000e+00> : vector<4x32xf32>
    %672 = tpu.matmul %670, %671, %cst_121 {dimension_numbers = #tpu.dot_dimension_numbers<[1], [0], [0], [1], [0, 0, 1, 1], [], []>} : vector<4x32xf32>, vector<32x32xf32>, vector<4x32xf32> -> vector<4x32xf32>
    %c0_122 = arith.constant 0 : index
    %c0_123 = arith.constant 0 : index
    %673 = vector.load %arg9[%c0_122, %c0_123] : memref<1x32xf32, #tpu.memory_space<vmem>>, vector<1x32xf32>
    %674 = vector.broadcast %673 : vector<1x32xf32> to vector<4x32xf32>
    %675 = arith.addf %672, %674 : vector<4x32xf32>
    %cst_124 = arith.constant 0.000000e+00 : f32
    %676 = vector.broadcast %cst_124 : f32 to vector<4x32xf32>
    %677 = arith.maximumf %675, %676 : vector<4x32xf32>
    %c0_125 = arith.constant 0 : index
    %c0_126 = arith.constant 0 : index
    %678 = vector.load %arg10[%c0_125, %c0_126] : memref<32x32xf32, #tpu.memory_space<vmem>>, vector<32x32xf32>
    %cst_127 = arith.constant dense<0.000000e+00> : vector<4x32xf32>
    %679 = tpu.matmul %677, %678, %cst_127 {dimension_numbers = #tpu.dot_dimension_numbers<[1], [0], [0], [1], [0, 0, 1, 1], [], []>} : vector<4x32xf32>, vector<32x32xf32>, vector<4x32xf32> -> vector<4x32xf32>
    %c0_128 = arith.constant 0 : index
    %c0_129 = arith.constant 0 : index
    %680 = vector.load %arg11[%c0_128, %c0_129] : memref<1x32xf32, #tpu.memory_space<vmem>>, vector<1x32xf32>
    %681 = vector.broadcast %680 : vector<1x32xf32> to vector<4x32xf32>
    %682 = arith.addf %679, %681 : vector<4x32xf32>
    %cst_130 = arith.constant dense<0.000000e+00> : vector<4x32xf32>
    %683 = tpu.matmul %668, %682, %cst_130 {dimension_numbers = #tpu.dot_dimension_numbers<[1], [0], [0], [1], [0, 0, 1, 1], [], []>} : vector<4x4xf32>, vector<4x32xf32>, vector<4x32xf32> -> vector<4x32xf32>
    %684 = arith.addf %682, %683 : vector<4x32xf32>
    %c0_131 = arith.constant 0 : index
    %c0_132 = arith.constant 0 : index
    %685 = vector.load %arg12[%c0_131, %c0_132] : memref<32x32xf32, #tpu.memory_space<vmem>>, vector<32x32xf32>
    %cst_133 = arith.constant dense<0.000000e+00> : vector<4x32xf32>
    %686 = tpu.matmul %684, %685, %cst_133 {dimension_numbers = #tpu.dot_dimension_numbers<[1], [0], [0], [1], [0, 0, 1, 1], [], []>} : vector<4x32xf32>, vector<32x32xf32>, vector<4x32xf32> -> vector<4x32xf32>
    %c0_134 = arith.constant 0 : index
    %c0_135 = arith.constant 0 : index
    %687 = vector.load %arg13[%c0_134, %c0_135] : memref<1x32xf32, #tpu.memory_space<vmem>>, vector<1x32xf32>
    %688 = vector.broadcast %687 : vector<1x32xf32> to vector<4x32xf32>
    %689 = arith.addf %686, %688 : vector<4x32xf32>
    %cst_136 = arith.constant 0.000000e+00 : f32
    %690 = vector.broadcast %cst_136 : f32 to vector<4x32xf32>
    %691 = arith.maximumf %689, %690 : vector<4x32xf32>
    %c0_137 = arith.constant 0 : index
    %c0_138 = arith.constant 0 : index
    %692 = vector.load %arg14[%c0_137, %c0_138] : memref<32x32xf32, #tpu.memory_space<vmem>>, vector<32x32xf32>
    %cst_139 = arith.constant dense<0.000000e+00> : vector<4x32xf32>
    %693 = tpu.matmul %691, %692, %cst_139 {dimension_numbers = #tpu.dot_dimension_numbers<[1], [0], [0], [1], [0, 0, 1, 1], [], []>} : vector<4x32xf32>, vector<32x32xf32>, vector<4x32xf32> -> vector<4x32xf32>
    %c0_140 = arith.constant 0 : index
    %c0_141 = arith.constant 0 : index
    %694 = vector.load %arg15[%c0_140, %c0_141] : memref<1x32xf32, #tpu.memory_space<vmem>>, vector<1x32xf32>
    %695 = vector.broadcast %694 : vector<1x32xf32> to vector<4x32xf32>
    %696 = arith.addf %693, %695 : vector<4x32xf32>
    %697 = math.tanh %696 : vector<4x32xf32>
    %c0_142 = arith.constant 0 : index
    %c0_143 = arith.constant 0 : index
    %698 = vector.load %arg16[%c0_142, %c0_143] : memref<32x4xf32, #tpu.memory_space<vmem>>, vector<32x4xf32>
    %cst_144 = arith.constant dense<0.000000e+00> : vector<4x4xf32>
    %699 = tpu.matmul %697, %698, %cst_144 {dimension_numbers = #tpu.dot_dimension_numbers<[1], [0], [0], [1], [0, 0, 1, 1], [], []>} : vector<4x32xf32>, vector<32x4xf32>, vector<4x4xf32> -> vector<4x4xf32>
    %c0_145 = arith.constant 0 : index
    %c0_146 = arith.constant 0 : index
    %700 = vector.load %arg17[%c0_145, %c0_146] : memref<1x4xf32, #tpu.memory_space<vmem>>, vector<1x4xf32>
    %701 = vector.broadcast %700 : vector<1x4xf32> to vector<4x4xf32>
    %702 = arith.addf %699, %701 : vector<4x4xf32>
    %c0_147 = arith.constant 0 : index
    %c0_148 = arith.constant 0 : index
    %703 = vector.load %arg18[%c0_147, %c0_148] : memref<4x4xf32, #tpu.memory_space<vmem>>, vector<4x4xf32>
    tpu.vector_store %arg18[%c0_147, %c0_148], %702 {strides = array<i32>} : memref<4x4xf32, #tpu.memory_space<vmem>>, vector<4x4xf32>,
    return
  }
}

</mosaic_0001>

<llo_original>
// kernel: model_forward.1
$region0: #{model_forward.1}
  #allocation0 [shape = 'u32[]', space=smem, size = 0x4, offset = 0x4, fixed_abs, tag = 'smem constant byte address 0x4 - core index']
  #allocation1 [shape = 'u32[72,128]{1,0:T(1,128)}', space=vmem, size = 0x9000, scoped, tag = 'internal scratch']
  #allocation2 [shape = 'f32[1,1]{1,0:T(1,128)S(1)}', space=vmem, size = 0x200, scoped, tag = 'scoped memory for model_forward.1']
  %s0 = inlined_call_operand.vmem [shape: f32[8,4,8], index: 0, kind: input, shape index: {}]
  %s1 = inlined_call_operand.hbm [shape: s32[2,5], index: 1, kind: input, shape index: {}]
  %s2 = inlined_call_operand.hbm [shape: f32[80,256], index: 2, kind: input, shape index: {}]
  %s3 = inlined_call_operand.vmem [shape: f32[1,256], index: 3, kind: input, shape index: {}]
  %s4 = inlined_call_operand.hbm [shape: f32[32,32], index: 4, kind: input, shape index: {}]
  %s5 = inlined_call_operand.hbm [shape: f32[1,32], index: 5, kind: input, shape index: {}]
  %s6 = inlined_call_operand.hbm [shape: f32[32,32], index: 6, kind: input, shape index: {}]
  %s7 = inlined_call_operand.<no memory space> [shape: f32[1,1], index: 7, kind: input, shape index: {}]
  %s8 = inlined_call_operand.hbm [shape: f32[32,32], index: 8, kind: input, shape index: {}]
  %s9 = inlined_call_operand.hbm [shape: f32[1,32], index: 9, kind: input, shape index: {}]
  %s10 = inlined_call_operand.hbm [shape: f32[32,32], index: 10, kind: input, shape index: {}]
  %s11 = inlined_call_operand.vmem [shape: f32[1,32], index: 11, kind: input, shape index: {}]
  %s12 = inlined_call_operand.hbm [shape: f32[32,32], index: 12, kind: input, shape index: {}]
  %s13 = inlined_call_operand.vmem [shape: f32[1,32], index: 13, kind: input, shape index: {}]
  %s14 = inlined_call_operand.vmem [shape: f32[32,32], index: 14, kind: input, shape index: {}]
  %s15 = inlined_call_operand.vmem [shape: f32[1,32], index: 15, kind: input, shape index: {}]
  %s16 = inlined_call_operand.vmem [shape: f32[32,4], index: 16, kind: input, shape index: {}]
  %s17 = inlined_call_operand.vmem [shape: f32[1,4], index: 17, kind: input, shape index: {}]
  %s18 = inlined_call_operand.hbm [shape: f32[4,4], index: 18, kind: output, shape index: {}]
  %s19 = sld [smem:[#allocation0]]
  $region118: #{model_forward.1} parent=0
    _
  %s21 = ssub.s32 1, %s19
  %s22 = scalar_select 0, %s21, %s19
  %v23 = vstv %s7
  %24 = vst [vmem:[#allocation2] sm:$0x1] %v23
  $region1: #{model_forward.1} parent=0
    #allocation3 [shape = 'u8[1024]{0}', space=smem, size = 0x400, scoped, tag = 'input window, operand 1, single buffered']
    #allocation4 [shape = 's32[1]{0}', space=sflag, size = 0x4, scoped, tag = 'scoped memory for model_forward.1']
    #allocation5 [shape = 's32[1]{0}', space=sflag, size = 0x4, scoped, tag = 'scoped memory for model_forward.1']
    #allocation6 [shape = 's32[1]{0}', space=sflag, size = 0x4, scoped, tag = 'scoped memory for model_forward.1']
    #allocation7 [shape = 'u8[81920]{0}', space=vmem, size = 0x14000, scoped, tag = 'input window, operand 2, single buffered']
    #allocation8 [shape = 'u8[16384]{0}', space=vmem, size = 0x4000, scoped, tag = 'input window, operand 4, single buffered']
    #allocation9 [shape = 's32[1]{0}', space=sflag, size = 0x4, scoped, tag = 'scoped memory for model_forward.1']
    #allocation10 [shape = 'u8[512]{0}', space=vmem, size = 0x400, scoped, tag = 'input window, operand 5, single buffered']
    #allocation11 [shape = 'u8[16384]{0}', space=vmem, size = 0x4000, scoped, tag = 'input window, operand 6, single buffered']
    #allocation12 [shape = 's32[1]{0}', space=sflag, size = 0x4, scoped, tag = 'scoped memory for model_forward.1']
    #allocation13 [shape = 'u8[16384]{0}', space=vmem, size = 0x4000, scoped, tag = 'input window, operand 8, single buffered']
    #allocation14 [shape = 'u8[512]{0}', space=vmem, size = 0x400, scoped, tag = 'input window, operand 9, single buffered']
    #allocation15 [shape = 's32[1]{0}', space=sflag, size = 0x4, scoped, tag = 'scoped memory for model_forward.1']
    #allocation16 [shape = 'u8[16384]{0}', space=vmem, size = 0x4000, scoped, tag = 'input window, operand 10, single buffered']
    #allocation17 [shape = 'u8[16384]{0}', space=vmem, size = 0x4000, scoped, tag = 'input window, operand 12, single buffered']
    #allocation18 [shape = 's32[1]{0}', space=sflag, size = 0x4, scoped, tag = 'scoped memory for model_forward.1']
    #allocation19 [shape = 'u8[2048]{0}', space=vmem, size = 0x800, scoped, tag = 'output window, operand 0, single buffered']
    %25 = vsyncpa [#allocation6], 0
    %26 = vsyncpa [#allocation4], 0
    %27 = vsyncpa [#allocation9], 0
    %28 = vsyncpa [#allocation12], 0
    %29 = vsyncpa [#allocation15], 0
    %30 = vsyncpa [#allocation18], 0
    %31 = vsyncpa [#allocation5], 0
    // Predicated region
    $region2: #{model_forward.1} parent=1 // pred_check
      _
    $region3: #{model_forward.1} parent=1 // pred_check_branch
      %33 = sbr.rel (0) target = $region5
    $region4: #{model_forward.1} parent=1 // pred_region
      _
    $region5: #{model_forward.1} parent=1 // pred_fallthru
      _
    // Predicated region
    $region6: #{model_forward.1} parent=1 // pred_check
      _
    $region7: #{model_forward.1} parent=1 // pred_check_branch
      %35 = sbr.rel (0) target = $region9
    $region8: #{model_forward.1} parent=1 // pred_region
      %37 = vsyncadd [#allocation6], 0
      %s39 = sshll.u32 %s1, 4
      %s40 = int_to_ptr.hbm [resolvable:$true] %s39
      %42 = dma.hbm_to_smem %s40, 32, [#allocation3], [#allocation6]
    $region9: #{model_forward.1} parent=1 // pred_fallthru
      _
    // Predicated region
    $region10: #{model_forward.1} parent=1 // pred_check
      _
    $region11: #{model_forward.1} parent=1 // pred_check_branch
      %44 = sbr.rel (0) target = $region13
    $region12: #{model_forward.1} parent=1 // pred_region
      %46 = vsyncadd [#allocation4], 0
      %s47 = sshll.u32 %s2, 4
      %s48 = int_to_ptr.hbm [resolvable:$true] %s47
      %s49 = sshll.u32 [#allocation7], 4
      %s50 = int_to_ptr.vmem [resolvable:$true] %s49
      %55 = dma.hbm_to_vmem [thread:$0]  %s48, 2560, %s50, [#allocation4], 256, 256, 16
    $region13: #{model_forward.1} parent=1 // pred_fallthru
      _
    // Predicated region
    $region14: #{model_forward.1} parent=1 // pred_check
      _
    $region15: #{model_forward.1} parent=1 // pred_check_branch
      %57 = sbr.rel (0) target = $region17
    $region16: #{model_forward.1} parent=1 // pred_region
      _
    $region17: #{model_forward.1} parent=1 // pred_fallthru
      _
    // Predicated region
    $region18: #{model_forward.1} parent=1 // pred_check
      _
    $region19: #{model_forward.1} parent=1 // pred_check_branch
      %59 = sbr.rel (0) target = $region21
    $region20: #{model_forward.1} parent=1 // pred_region
      %61 = vsyncadd [#allocation9], 0
      %s62 = sshll.u32 %s4, 4
      %s63 = int_to_ptr.hbm [resolvable:$true] %s62
      %s64 = sshll.u32 [#allocation8], 4
      %s65 = int_to_ptr.vmem [resolvable:$true] %s64
      %70 = dma.hbm_to_vmem [thread:$0]  %s63, 512, %s65, [#allocation9], 128, 128, 8
    $region21: #{model_forward.1} parent=1 // pred_fallthru
      _
    // Predicated region
    $region22: #{model_forward.1} parent=1 // pred_check
      _
    $region23: #{model_forward.1} parent=1 // pred_check_branch
      %72 = sbr.rel (0) target = $region25
    $region24: #{model_forward.1} parent=1 // pred_region
      %74 = vsyncadd [#allocation9], 0
      %s76 = sshll.u32 %s5, 4
      %s77 = int_to_ptr.hbm [resolvable:$true] %s76
      %s78 = sshll.u32 [#allocation10], 4
      %s79 = int_to_ptr.vmem [resolvable:$true] %s78
      %81 = dma.hbm_to_vmem [thread:$0]  %s77, 16, %s79, [#allocation9]
    $region25: #{model_forward.1} parent=1 // pred_fallthru
      _
    // Predicated region
    $region26: #{model_forward.1} parent=1 // pred_check
      _
    $region27: #{model_forward.1} parent=1 // pred_check_branch
      %83 = sbr.rel (0) target = $region29
    $region28: #{model_forward.1} parent=1 // pred_region
      %85 = vsyncadd [#allocation12], 0
      %s86 = sshll.u32 %s6, 4
      %s87 = int_to_ptr.hbm [resolvable:$true] %s86
      %s88 = sshll.u32 [#allocation11], 4
      %s89 = int_to_ptr.vmem [resolvable:$true] %s88
      %94 = dma.hbm_to_vmem [thread:$0]  %s87, 512, %s89, [#allocation12], 128, 128, 8
    $region29: #{model_forward.1} parent=1 // pred_fallthru
      _
    // Predicated region
    $region30: #{model_forward.1} parent=1 // pred_check
      _
    $region31: #{model_forward.1} parent=1 // pred_check_branch
      %96 = sbr.rel (0) target = $region33
    $region32: #{model_forward.1} parent=1 // pred_region
      _
    $region33: #{model_forward.1} parent=1 // pred_fallthru
      _
    // Predicated region
    $region34: #{model_forward.1} parent=1 // pred_check
      _
    $region35: #{model_forward.1} parent=1 // pred_check_branch
      %98 = sbr.rel (0) target = $region37
    $region36: #{model_forward.1} parent=1 // pred_region
      %100 = vsyncadd [#allocation12], 0
      %s101 = sshll.u32 %s8, 4
      %s102 = int_to_ptr.hbm [resolvable:$true] %s101
      %s103 = sshll.u32 [#allocation13], 4
      %s104 = int_to_ptr.vmem [resolvable:$true] %s103
      %109 = dma.hbm_to_vmem [thread:$0]  %s102, 512, %s104, [#allocation12], 128, 128, 8
    $region37: #{model_forward.1} parent=1 // pred_fallthru
      _
    // Predicated region
    $region38: #{model_forward.1} parent=1 // pred_check
      _
    $region39: #{model_forward.1} parent=1 // pred_check_branch
      %111 = sbr.rel (0) target = $region41
    $region40: #{model_forward.1} parent=1 // pred_region
      %113 = vsyncadd [#allocation15], 0
      %s115 = sshll.u32 %s9, 4
      %s116 = int_to_ptr.hbm [resolvable:$true] %s115
      %s117 = sshll.u32 [#allocation14], 4
      %s118 = int_to_ptr.vmem [resolvable:$true] %s117
      %120 = dma.hbm_to_vmem [thread:$0]  %s116, 16, %s118, [#allocation15]
    $region41: #{model_forward.1} parent=1 // pred_fallthru
      _
    // Predicated region
    $region42: #{model_forward.1} parent=1 // pred_check
      _
    $region43: #{model_forward.1} parent=1 // pred_check_branch
      %122 = sbr.rel (0) target = $region45
    $region44: #{model_forward.1} parent=1 // pred_region
      %124 = vsyncadd [#allocation15], 0
      %s125 = sshll.u32 %s10, 4
      %s126 = int_to_ptr.hbm [resolvable:$true] %s125
      %s127 = sshll.u32 [#allocation16], 4
      %s128 = int_to_ptr.vmem [resolvable:$true] %s127
      %133 = dma.hbm_to_vmem [thread:$0]  %s126, 512, %s128, [#allocation15], 128, 128, 8
    $region45: #{model_forward.1} parent=1 // pred_fallthru
      _
    // Predicated region
    $region46: #{model_forward.1} parent=1 // pred_check
      _
    $region47: #{model_forward.1} parent=1 // pred_check_branch
      %135 = sbr.rel (0) target = $region49
    $region48: #{model_forward.1} parent=1 // pred_region
      _
    $region49: #{model_forward.1} parent=1 // pred_fallthru
      _
    // Predicated region
    $region50: #{model_forward.1} parent=1 // pred_check
      _
    $region51: #{model_forward.1} parent=1 // pred_check_branch
      %137 = sbr.rel (0) target = $region53
    $region52: #{model_forward.1} parent=1 // pred_region
      %139 = vsyncadd [#allocation18], 0
      %s140 = sshll.u32 %s12, 4
      %s141 = int_to_ptr.hbm [resolvable:$true] %s140
      %s142 = sshll.u32 [#allocation17], 4
      %s143 = int_to_ptr.vmem [resolvable:$true] %s142
      %148 = dma.hbm_to_vmem [thread:$0]  %s141, 512, %s143, [#allocation18], 128, 128, 8
    $region53: #{model_forward.1} parent=1 // pred_fallthru
      _
    // Predicated region
    $region54: #{model_forward.1} parent=1 // pred_check
      _
    $region55: #{model_forward.1} parent=1 // pred_check_branch
      %150 = sbr.rel (0) target = $region57
    $region56: #{model_forward.1} parent=1 // pred_region
      _
    $region57: #{model_forward.1} parent=1 // pred_fallthru
      _
    // Predicated region
    $region58: #{model_forward.1} parent=1 // pred_check
      _
    $region59: #{model_forward.1} parent=1 // pred_check_branch
      %152 = sbr.rel (0) target = $region61
    $region60: #{model_forward.1} parent=1 // pred_region
      _
    $region61: #{model_forward.1} parent=1 // pred_fallthru
      _
    // Predicated region
    $region62: #{model_forward.1} parent=1 // pred_check
      _
    $region63: #{model_forward.1} parent=1 // pred_check_branch
      %154 = sbr.rel (0) target = $region65
    $region64: #{model_forward.1} parent=1 // pred_region
      _
    $region65: #{model_forward.1} parent=1 // pred_fallthru
      _
    // Predicated region
    $region66: #{model_forward.1} parent=1 // pred_check
      _
    $region67: #{model_forward.1} parent=1 // pred_check_branch
      %156 = sbr.rel (0) target = $region69
    $region68: #{model_forward.1} parent=1 // pred_region
      _
    $region69: #{model_forward.1} parent=1 // pred_fallthru
      _
    // Predicated region
    $region70: #{model_forward.1} parent=1 // pred_check
      _
    $region71: #{model_forward.1} parent=1 // pred_check_branch
      %158 = sbr.rel (0) target = $region73
    $region72: #{model_forward.1} parent=1 // pred_region
      _
    $region73: #{model_forward.1} parent=1 // pred_fallthru
      _
    // Predicated region
    $region74: #{model_forward.1} parent=1 // pred_check
      _
    $region75: #{model_forward.1} parent=1 // pred_check_branch
      %160 = sbr.rel (0) target = $region77
    $region76: #{model_forward.1} parent=1 // pred_region
      %162 = dma.done [#allocation6], 32
    $region77: #{model_forward.1} parent=1 // pred_fallthru
      _
    // Predicated region
    $region78: #{model_forward.1} parent=1 // pred_check
      _
    $region79: #{model_forward.1} parent=1 // pred_check_branch
      %164 = sbr.rel (0) target = $region81
    $region80: #{model_forward.1} parent=1 // pred_region
      %166 = dma.done [#allocation4], 2560
    $region81: #{model_forward.1} parent=1 // pred_fallthru
      _
    // Predicated region
    $region82: #{model_forward.1} parent=1 // pred_check
      _
    $region83: #{model_forward.1} parent=1 // pred_check_branch
      %168 = sbr.rel (0) target = $region85
    $region84: #{model_forward.1} parent=1 // pred_region
      %170 = dma.done [#allocation9], 512
    $region85: #{model_forward.1} parent=1 // pred_fallthru
      _
    // Predicated region
    $region86: #{model_forward.1} parent=1 // pred_check
      _
    $region87: #{model_forward.1} parent=1 // pred_check_branch
      %172 = sbr.rel (0) target = $region89
    $region88: #{model_forward.1} parent=1 // pred_region
      %174 = dma.done [#allocation9], 16
    $region89: #{model_forward.1} parent=1 // pred_fallthru
      _
    // Predicated region
    $region90: #{model_forward.1} parent=1 // pred_check
      _
    $region91: #{model_forward.1} parent=1 // pred_check_branch
      %176 = sbr.rel (0) target = $region93
    $region92: #{model_forward.1} parent=1 // pred_region
      %178 = dma.done [#allocation12], 512
    $region93: #{model_forward.1} parent=1 // pred_fallthru
      _
    // Predicated region
    $region94: #{model_forward.1} parent=1 // pred_check
      _
    $region95: #{model_forward.1} parent=1 // pred_check_branch
      %180 = sbr.rel (0) target = $region97
    $region96: #{model_forward.1} parent=1 // pred_region
      %182 = dma.done [#allocation12], 512
    $region97: #{model_forward.1} parent=1 // pred_fallthru
      _
    // Predicated region
    $region98: #{model_forward.1} parent=1 // pred_check
      _
    $region99: #{model_forward.1} parent=1 // pred_check_branch
      %184 = sbr.rel (0) target = $region101
    $region100: #{model_forward.1} parent=1 // pred_region
      %186 = dma.done [#allocation15], 16
    $region101: #{model_forward.1} parent=1 // pred_fallthru
      _
    // Predicated region
    $region102: #{model_forward.1} parent=1 // pred_check
      _
    $region103: #{model_forward.1} parent=1 // pred_check_branch
      %188 = sbr.rel (0) target = $region105
    $region104: #{model_forward.1} parent=1 // pred_region
      %190 = dma.done [#allocation15], 512
    $region105: #{model_forward.1} parent=1 // pred_fallthru
      _
    // Predicated region
    $region106: #{model_forward.1} parent=1 // pred_check
      _
    $region107: #{model_forward.1} parent=1 // pred_check_branch
      %192 = sbr.rel (0) target = $region109
    $region108: #{model_forward.1} parent=1 // pred_region
      %194 = dma.done [#allocation18], 512
    $region109: #{model_forward.1} parent=1 // pred_fallthru
      _
    %195 = sfence
    %v196 = vld [vmem:[%s0] sm:$0xf]
    %v197 = vld [vmem:[%s0 + $0x4] sm:$0xf]
    %v198 = vld [vmem:[%s0 + $0x8] sm:$0xf]
    %v199 = vld [vmem:[%s0 + $0xc] sm:$0xf]
    %v200 = vld [vmem:[%s0 + $0x10] sm:$0xf]
    %v201 = vld [vmem:[%s0 + $0x14] sm:$0xf]
    %v202 = vld [vmem:[%s0 + $0x18] sm:$0xf]
    %v203 = vld [vmem:[%s0 + $0x1c] sm:$0xf]
    %v204 = vld [vmem:[#allocation7] sm:$0xff]
    %v205 = vld [vmem:[#allocation7 + $0x8] sm:$0xff]
    %v206 = vld [vmem:[#allocation7 + $0x10] sm:$0xff]
    %v207 = vld [vmem:[#allocation7 + $0x18] sm:$0xff]
    %v208 = vld [vmem:[#allocation7 + $0x20] sm:$0xff]
    %v209 = vld [vmem:[#allocation7 + $0x28] sm:$0xff]
    %v210 = vld [vmem:[#allocation7 + $0x30] sm:$0xff]
    %v211 = vld [vmem:[#allocation7 + $0x38] sm:$0xff]
    %v212 = vld [vmem:[#allocation7 + $0x40] sm:$0xff]
    %v213 = vld [vmem:[#allocation7 + $0x48] sm:$0xff]
    %v214 = vld [vmem:[#allocation7 + $0x50] sm:$0xff]
    %v215 = vld [vmem:[#allocation7 + $0x58] sm:$0xff]
    %v216 = vld [vmem:[#allocation7 + $0x60] sm:$0xff]
    %v217 = vld [vmem:[#allocation7 + $0x68] sm:$0xff]
    %v218 = vld [vmem:[#allocation7 + $0x70] sm:$0xff]
    %v219 = vld [vmem:[#allocation7 + $0x78] sm:$0xff]
    %v220 = vld [vmem:[#allocation7 + $0x80] sm:$0xff]
    %v221 = vld [vmem:[#allocation7 + $0x88] sm:$0xff]
    %v222 = vld [vmem:[#allocation7 + $0x90] sm:$0xff]
    %v223 = vld [vmem:[#allocation7 + $0x98] sm:$0xff]
    %v224 = vld [vmem:[%s3] sm:$0x3]
    %226 = vrot.lane.b32.xlu0 %v203, 8
    %v227 = vpop.permute.xlu0 %226
    %vm229 = vcmask 64512
    %v230 = vsel %vm229, %v196, %v227
    %vm231 = vcmask 130048
    %v232 = vsel %vm231, %v230, 0.0
    %vm233 = vcmask 392192
    %v234 = vsel %vm233, %v232, 0.0
    %v236 = vperm.slane %v224, 0
    %v237 = vperm.slane %v224, 1
    %vm240 = vcmask 654336
    %v242 = vsel %vm240, %v234, 0
    %244 = vmatpush.msra.mxu0 0.0
    %245 = vmatpush.msra.mxu0 0.0
    %246 = vmatpush.msra.mxu0 0.0
    %247 = vmatpush.msra.mxu0 0.0
    %248 = vmatpush.msra.mxu0 0.0
    %249 = vmatpush.msra.mxu0 0.0
    %250 = vmatpush.msra.mxu0 %v222
    %251 = vmatpush.msra.mxu0 %v220
    %252 = vmatpush.msra.mxu0 %v218
    %253 = vmatpush.msra.mxu0 %v216
    %254 = vmatpush.msra.mxu0 %v214
    %255 = vmatpush.msra.mxu0 %v212
    %256 = vmatpush.msra.mxu0 %v210
    %257 = vmatpush.msra.mxu0 %v208
    %258 = vmatpush.msra.mxu0 %v206
    %259 = vmatpush.msra.mxu0 %v204
    %260 = vmatmul.f32.gmra.mxu0 %v242
    %v261 = vpop.f32.mrf.mxu0
    %v262 = vadd.f32 %v236, %v261
    %263 = vdwg.mxu0
    %264 = vmatpush.msra.mxu0 0.0
    %265 = vmatpush.msra.mxu0 0.0
    %266 = vmatpush.msra.mxu0 0.0
    %267 = vmatpush.msra.mxu0 0.0
    %268 = vmatpush.msra.mxu0 0.0
    %269 = vmatpush.msra.mxu0 0.0
    %270 = vmatpush.msra.mxu0 %v223
    %271 = vmatpush.msra.mxu0 %v221
    %272 = vmatpush.msra.mxu0 %v219
    %273 = vmatpush.msra.mxu0 %v217
    %274 = vmatpush.msra.mxu0 %v215
    %275 = vmatpush.msra.mxu0 %v213
    %276 = vmatpush.msra.mxu0 %v211
    %277 = vmatpush.msra.mxu0 %v209
    %278 = vmatpush.msra.mxu0 %v207
    %279 = vmatpush.msra.mxu0 %v205
    %280 = vmatmul.f32.gmra.mxu0 %v242
    %v281 = vpop.f32.mrf.mxu0
    %v282 = vadd.f32 %v237, %v281
    %283 = vdwg.mxu0
    %v284 = vxor.u32 %v262, 2147483648
    %v285 = vmul.f32 %v284, 1.442695
    %v286 = vpow.pop %v285
    %v287 = vadd.f32 %v286, 1.0
    %v288 = vrcp.pop %v287
    %v289 = vmul.f32 %v287, %v288
    %v290 = vsub.f32 1.0, %v289
    %v291 = vmul.f32 %v288, %v290
    %v292 = vadd.f32 %v288, %v291
    %vm293 = vweird.f32 %v287
    %vm294 = vweird.f32 %v288
    %vm295 = vmor %vm293, %vm294
    %v296 = vsel %vm295, %v288, %v292
    %v297 = vand.u32 2147483647, %v287
    %vm298 = vcmp.eq.f32.partialorder %v297, 8.507059e+37
    %v299 = vand.u32 %v287, 2147483648
    %v300 = vor.u32 1.1754944e-38, %v299
    %v301 = vsel %vm298, %v300, %v296
    %v302 = vmul.f32 1.0, %v301
    %v303 = vtanh.pop %v262
    %v304 = vmul.f32 %v302, 0.0
    %306 = vrot.lane.b32.xlu0 %v303, 64
    %v307 = vpop.permute.xlu0 %306
    %v309 = vmul.f32 %v302, %v307
    %311 = vrot.lane.b32.xlu0 %v309, 32
    %v312 = vpop.permute.xlu0 %311
    %v314 = vadd.f32 %v304, %v312
    %v315 = vtanh.pop %v314
    %317 = vrot.lane.b32.xlu0 %v315, 64
    %v318 = vpop.permute.xlu0 %317
    %v320 = vmul.f32 %v302, %v318
    %v321 = vxor.u32 %v282, 2147483648
    %v322 = vmul.f32 %v321, 1.442695
    %v323 = vpow.pop %v322
    %v324 = vadd.f32 %v323, 1.0
    %v325 = vrcp.pop %v324
    %v326 = vmul.f32 %v324, %v325
    %v327 = vsub.f32 1.0, %v326
    %v328 = vmul.f32 %v325, %v327
    %v329 = vadd.f32 %v325, %v328
    %vm330 = vweird.f32 %v324
    %vm331 = vweird.f32 %v325
    %vm332 = vmor %vm330, %vm331
    %v333 = vsel %vm332, %v325, %v329
    %v334 = vand.u32 2147483647, %v324
    %vm335 = vcmp.eq.f32.partialorder %v334, 8.507059e+37
    %v336 = vand.u32 %v324, 2147483648
    %v337 = vor.u32 1.1754944e-38, %v336
    %v338 = vsel %vm335, %v337, %v333
    %v339 = vmul.f32 1.0, %v338
    %v340 = vtanh.pop %v282
    %v341 = vmul.f32 %v339, 0.0
    %343 = vrot.lane.b32.xlu0 %v340, 64
    %v344 = vpop.permute.xlu0 %343
    %v346 = vmul.f32 %v339, %v344
    %348 = vrot.lane.b32.xlu0 %v346, 32
    %v349 = vpop.permute.xlu0 %348
    %v351 = vadd.f32 %v341, %v349
    %v352 = vtanh.pop %v351
    %354 = vrot.lane.b32.xlu0 %v352, 64
    %v355 = vpop.permute.xlu0 %354
    %v357 = vmul.f32 %v339, %v355
    %359 = vrot.lane.b32.xlu0 %v202, 8
    %v360 = vpop.permute.xlu0 %359
    %363 = vrot.lane.b32.xlu0 %v320, 48
    %v364 = vpop.permute.xlu0 %363
    %367 = vrot.lane.b32.xlu0 %v357, 80
    %v368 = vpop.permute.xlu0 %367
    %v370 = vsel %vm229, %v197, %v360
    %v371 = vsel %vm231, %v370, %v364
    %v372 = vsel %vm233, %v371, %v368
    %v374 = vsel %vm240, %v372, 0
    %376 = vmatpush.msra.mxu0 0.0
    %377 = vmatpush.msra.mxu0 0.0
    %378 = vmatpush.msra.mxu0 0.0
    %379 = vmatpush.msra.mxu0 0.0
    %380 = vmatpush.msra.mxu0 0.0
    %381 = vmatpush.msra.mxu0 0.0
    %382 = vmatpush.msra.mxu0 %v222
    %383 = vmatpush.msra.mxu0 %v220
    %384 = vmatpush.msra.mxu0 %v218
    %385 = vmatpush.msra.mxu0 %v216
    %386 = vmatpush.msra.mxu0 %v214
    %387 = vmatpush.msra.mxu0 %v212
    %388 = vmatpush.msra.mxu0 %v210
    %389 = vmatpush.msra.mxu0 %v208
    %390 = vmatpush.msra.mxu0 %v206
    %391 = vmatpush.msra.mxu0 %v204
    %392 = vmatmul.f32.gmra.mxu0 %v374
    %v393 = vpop.f32.mrf.mxu0
    %v394 = vadd.f32 %v236, %v393
    %395 = vdwg.mxu0
    %396 = vmatpush.msra.mxu0 0.0
    %397 = vmatpush.msra.mxu0 0.0
    %398 = vmatpush.msra.mxu0 0.0
    %399 = vmatpush.msra.mxu0 0.0
    %400 = vmatpush.msra.mxu0 0.0
    %401 = vmatpush.msra.mxu0 0.0
    %402 = vmatpush.msra.mxu0 %v223
    %403 = vmatpush.msra.mxu0 %v221
    %404 = vmatpush.msra.mxu0 %v219
    %405 = vmatpush.msra.mxu0 %v217
    %406 = vmatpush.msra.mxu0 %v215
    %407 = vmatpush.msra.mxu0 %v213
    %408 = vmatpush.msra.mxu0 %v211
    %409 = vmatpush.msra.mxu0 %v209
    %410 = vmatpush.msra.mxu0 %v207
    %411 = vmatpush.msra.mxu0 %v205
    %412 = vmatmul.f32.gmra.mxu0 %v374
    %v413 = vpop.f32.mrf.mxu0
    %v414 = vadd.f32 %v237, %v413
    %415 = vdwg.mxu0
    %v416 = vxor.u32 %v394, 2147483648
    %v417 = vmul.f32 %v416, 1.442695
    %v418 = vpow.pop %v417
    %v419 = vadd.f32 %v418, 1.0
    %v420 = vrcp.pop %v419
    %v421 = vmul.f32 %v419, %v420
    %v422 = vsub.f32 1.0, %v421
    %v423 = vmul.f32 %v420, %v422
    %v424 = vadd.f32 %v420, %v423
    %vm425 = vweird.f32 %v419
    %vm426 = vweird.f32 %v420
    %vm427 = vmor %vm425, %vm426
    %v428 = vsel %vm427, %v420, %v424
    %v429 = vand.u32 2147483647, %v419
    %vm430 = vcmp.eq.f32.partialorder %v429, 8.507059e+37
    %v431 = vand.u32 %v419, 2147483648
    %v432 = vor.u32 1.1754944e-38, %v431
    %v433 = vsel %vm430, %v432, %v428
    %v434 = vmul.f32 1.0, %v433
    %v435 = vtanh.pop %v394
    %v436 = vmul.f32 %v434, %v314
    %438 = vrot.lane.b32.xlu0 %v435, 64
    %v439 = vpop.permute.xlu0 %438
    %v441 = vmul.f32 %v434, %v439
    %443 = vrot.lane.b32.xlu0 %v441, 32
    %v444 = vpop.permute.xlu0 %443
    %v446 = vadd.f32 %v436, %v444
    %v447 = vtanh.pop %v446
    %449 = vrot.lane.b32.xlu0 %v447, 64
    %v450 = vpop.permute.xlu0 %449
    %v452 = vmul.f32 %v434, %v450
    %v453 = vxor.u32 %v414, 2147483648
    %v454 = vmul.f32 %v453, 1.442695
    %v455 = vpow.pop %v454
    %v456 = vadd.f32 %v455, 1.0
    %v457 = vrcp.pop %v456
    %v458 = vmul.f32 %v456, %v457
    %v459 = vsub.f32 1.0, %v458
    %v460 = vmul.f32 %v457, %v459
    %v461 = vadd.f32 %v457, %v460
    %vm462 = vweird.f32 %v456
    %vm463 = vweird.f32 %v457
    %vm464 = vmor %vm462, %vm463
    %v465 = vsel %vm464, %v457, %v461
    %v466 = vand.u32 2147483647, %v456
    %vm467 = vcmp.eq.f32.partialorder %v466, 8.507059e+37
    %v468 = vand.u32 %v456, 2147483648
    %v469 = vor.u32 1.1754944e-38, %v468
    %v470 = vsel %vm467, %v469, %v465
    %v471 = vmul.f32 1.0, %v470
    %v472 = vtanh.pop %v414
    %v473 = vmul.f32 %v471, %v351
    %475 = vrot.lane.b32.xlu0 %v472, 64
    %v476 = vpop.permute.xlu0 %475
    %v478 = vmul.f32 %v471, %v476
    %480 = vrot.lane.b32.xlu0 %v478, 32
    %v481 = vpop.permute.xlu0 %480
    %v483 = vadd.f32 %v473, %v481
    %v484 = vtanh.pop %v483
    %486 = vrot.lane.b32.xlu0 %v484, 64
    %v487 = vpop.permute.xlu0 %486
    %v489 = vmul.f32 %v471, %v487
    %491 = vrot.lane.b32.xlu0 %v201, 8
    %v492 = vpop.permute.xlu0 %491
    %495 = vrot.lane.b32.xlu0 %v452, 48
    %v496 = vpop.permute.xlu0 %495
    %499 = vrot.lane.b32.xlu0 %v489, 80
    %v500 = vpop.permute.xlu0 %499
    %v502 = vsel %vm229, %v198, %v492
    %v503 = vsel %vm231, %v502, %v496
    %v504 = vsel %vm233, %v503, %v500
    %v506 = vsel %vm240, %v504, 0
    %508 = vmatpush.msra.mxu0 0.0
    %509 = vmatpush.msra.mxu0 0.0
    %510 = vmatpush.msra.mxu0 0.0
    %511 = vmatpush.msra.mxu0 0.0
    %512 = vmatpush.msra.mxu0 0.0
    %513 = vmatpush.msra.mxu0 0.0
    %514 = vmatpush.msra.mxu0 %v222
    %515 = vmatpush.msra.mxu0 %v220
    %516 = vmatpush.msra.mxu0 %v218
    %517 = vmatpush.msra.mxu0 %v216
    %518 = vmatpush.msra.mxu0 %v214
    %519 = vmatpush.msra.mxu0 %v212
    %520 = vmatpush.msra.mxu0 %v210
    %521 = vmatpush.msra.mxu0 %v208
    %522 = vmatpush.msra.mxu0 %v206
    %523 = vmatpush.msra.mxu0 %v204
    %524 = vmatmul.f32.gmra.mxu0 %v506
    %v525 = vpop.f32.mrf.mxu0
    %v526 = vadd.f32 %v236, %v525
    %527 = vdwg.mxu0
    %528 = vmatpush.msra.mxu0 0.0
    %529 = vmatpush.msra.mxu0 0.0
    %530 = vmatpush.msra.mxu0 0.0
    %531 = vmatpush.msra.mxu0 0.0
    %532 = vmatpush.msra.mxu0 0.0
    %533 = vmatpush.msra.mxu0 0.0
    %534 = vmatpush.msra.mxu0 %v223
    %535 = vmatpush.msra.mxu0 %v221
    %536 = vmatpush.msra.mxu0 %v219
    %537 = vmatpush.msra.mxu0 %v217
    %538 = vmatpush.msra.mxu0 %v215
    %539 = vmatpush.msra.mxu0 %v213
    %540 = vmatpush.msra.mxu0 %v211
    %541 = vmatpush.msra.mxu0 %v209
    %542 = vmatpush.msra.mxu0 %v207
    %543 = vmatpush.msra.mxu0 %v205
    %544 = vmatmul.f32.gmra.mxu0 %v506
    %v545 = vpop.f32.mrf.mxu0
    %v546 = vadd.f32 %v237, %v545
    %547 = vdwg.mxu0
    %v548 = vxor.u32 %v526, 2147483648
    %v549 = vmul.f32 %v548, 1.442695
    %v550 = vpow.pop %v549
    %v551 = vadd.f32 %v550, 1.0
    %v552 = vrcp.pop %v551
    %v553 = vmul.f32 %v551, %v552
    %v554 = vsub.f32 1.0, %v553
    %v555 = vmul.f32 %v552, %v554
    %v556 = vadd.f32 %v552, %v555
    %vm557 = vweird.f32 %v551
    %vm558 = vweird.f32 %v552
    %vm559 = vmor %vm557, %vm558
    %v560 = vsel %vm559, %v552, %v556
    %v561 = vand.u32 2147483647, %v551
    %vm562 = vcmp.eq.f32.partialorder %v561, 8.507059e+37
    %v563 = vand.u32 %v551, 2147483648
    %v564 = vor.u32 1.1754944e-38, %v563
    %v565 = vsel %vm562, %v564, %v560
    %v566 = vmul.f32 1.0, %v565
    %v567 = vtanh.pop %v526
    %v568 = vmul.f32 %v566, %v446
    %570 = vrot.lane.b32.xlu0 %v567, 64
    %v571 = vpop.permute.xlu0 %570
    %v573 = vmul.f32 %v566, %v571
    %575 = vrot.lane.b32.xlu0 %v573, 32
    %v576 = vpop.permute.xlu0 %575
    %v578 = vadd.f32 %v568, %v576
    %v579 = vtanh.pop %v578
    %581 = vrot.lane.b32.xlu0 %v579, 64
    %v582 = vpop.permute.xlu0 %581
    %v584 = vmul.f32 %v566, %v582
    %v585 = vxor.u32 %v546, 2147483648
    %v586 = vmul.f32 %v585, 1.442695
    %v587 = vpow.pop %v586
    %v588 = vadd.f32 %v587, 1.0
    %v589 = vrcp.pop %v588
    %v590 = vmul.f32 %v588, %v589
    %v591 = vsub.f32 1.0, %v590
    %v592 = vmul.f32 %v589, %v591
    %v593 = vadd.f32 %v589, %v592
    %vm594 = vweird.f32 %v588
    %vm595 = vweird.f32 %v589
    %vm596 = vmor %vm594, %vm595
    %v597 = vsel %vm596, %v589, %v593
    %v598 = vand.u32 2147483647, %v588
    %vm599 = vcmp.eq.f32.partialorder %v598, 8.507059e+37
    %v600 = vand.u32 %v588, 2147483648
    %v601 = vor.u32 1.1754944e-38, %v600
    %v602 = vsel %vm599, %v601, %v597
    %v603 = vmul.f32 1.0, %v602
    %v604 = vtanh.pop %v546
    %v605 = vmul.f32 %v603, %v483
    %607 = vrot.lane.b32.xlu0 %v604, 64
    %v608 = vpop.permute.xlu0 %607
    %v610 = vmul.f32 %v603, %v608
    %612 = vrot.lane.b32.xlu0 %v610, 32
    %v613 = vpop.permute.xlu0 %612
    %v615 = vadd.f32 %v605, %v613
    %v616 = vtanh.pop %v615
    %618 = vrot.lane.b32.xlu0 %v616, 64
    %v619 = vpop.permute.xlu0 %618
    %v621 = vmul.f32 %v603, %v619
    %623 = vrot.lane.b32.xlu0 %v200, 8
    %v624 = vpop.permute.xlu0 %623
    %627 = vrot.lane.b32.xlu0 %v584, 48
    %v628 = vpop.permute.xlu0 %627
    %631 = vrot.lane.b32.xlu0 %v621, 80
    %v632 = vpop.permute.xlu0 %631
    %v634 = vsel %vm229, %v199, %v624
    %v635 = vsel %vm231, %v634, %v628
    %v636 = vsel %vm233, %v635, %v632
    %v638 = vsel %vm240, %v636, 0
    %640 = vmatpush.msra.mxu0 0.0
    %641 = vmatpush.msra.mxu0 0.0
    %642 = vmatpush.msra.mxu0 0.0
    %643 = vmatpush.msra.mxu0 0.0
    %644 = vmatpush.msra.mxu0 0.0
    %645 = vmatpush.msra.mxu0 0.0
    %646 = vmatpush.msra.mxu0 %v222
    %647 = vmatpush.msra.mxu0 %v220
    %648 = vmatpush.msra.mxu0 %v218
    %649 = vmatpush.msra.mxu0 %v216
    %650 = vmatpush.msra.mxu0 %v214
    %651 = vmatpush.msra.mxu0 %v212
    %652 = vmatpush.msra.mxu0 %v210
    %653 = vmatpush.msra.mxu0 %v208
    %654 = vmatpush.msra.mxu0 %v206
    %655 = vmatpush.msra.mxu0 %v204
    %656 = vmatmul.f32.gmra.mxu0 %v638
    %v657 = vpop.f32.mrf.mxu0
    %v658 = vadd.f32 %v236, %v657
    %659 = vdwg.mxu0
    %660 = vmatpush.msra.mxu0 0.0
    %661 = vmatpush.msra.mxu0 0.0
    %662 = vmatpush.msra.mxu0 0.0
    %663 = vmatpush.msra.mxu0 0.0
    %664 = vmatpush.msra.mxu0 0.0
    %665 = vmatpush.msra.mxu0 0.0
    %666 = vmatpush.msra.mxu0 %v223
    %667 = vmatpush.msra.mxu0 %v221
    %668 = vmatpush.msra.mxu0 %v219
    %669 = vmatpush.msra.mxu0 %v217
    %670 = vmatpush.msra.mxu0 %v215
    %671 = vmatpush.msra.mxu0 %v213
    %672 = vmatpush.msra.mxu0 %v211
    %673 = vmatpush.msra.mxu0 %v209
    %674 = vmatpush.msra.mxu0 %v207
    %675 = vmatpush.msra.mxu0 %v205
    %676 = vmatmul.f32.gmra.mxu0 %v638
    %v677 = vpop.f32.mrf.mxu0
    %v678 = vadd.f32 %v237, %v677
    %679 = vdwg.mxu0
    %v680 = vxor.u32 %v658, 2147483648
    %v681 = vmul.f32 %v680, 1.442695
    %v682 = vpow.pop %v681
    %v683 = vadd.f32 %v682, 1.0
    %v684 = vrcp.pop %v683
    %v685 = vmul.f32 %v683, %v684
    %v686 = vsub.f32 1.0, %v685
    %v687 = vmul.f32 %v684, %v686
    %v688 = vadd.f32 %v684, %v687
    %vm689 = vweird.f32 %v683
    %vm690 = vweird.f32 %v684
    %vm691 = vmor %vm689, %vm690
    %v692 = vsel %vm691, %v684, %v688
    %v693 = vand.u32 2147483647, %v683
    %vm694 = vcmp.eq.f32.partialorder %v693, 8.507059e+37
    %v695 = vand.u32 %v683, 2147483648
    %v696 = vor.u32 1.1754944e-38, %v695
    %v697 = vsel %vm694, %v696, %v692
    %v698 = vmul.f32 1.0, %v697
    %v699 = vtanh.pop %v658
    %v700 = vmul.f32 %v698, %v578
    %702 = vrot.lane.b32.xlu0 %v699, 64
    %v703 = vpop.permute.xlu0 %702
    %v705 = vmul.f32 %v698, %v703
    %707 = vrot.lane.b32.xlu0 %v705, 32
    %v708 = vpop.permute.xlu0 %707
    %v710 = vadd.f32 %v700, %v708
    %v711 = vtanh.pop %v710
    %713 = vrot.lane.b32.xlu0 %v711, 64
    %v714 = vpop.permute.xlu0 %713
    %v716 = vmul.f32 %v698, %v714
    %v717 = vxor.u32 %v678, 2147483648
    %v718 = vmul.f32 %v717, 1.442695
    %v719 = vpow.pop %v718
    %v720 = vadd.f32 %v719, 1.0
    %v721 = vrcp.pop %v720
    %v722 = vmul.f32 %v720, %v721
    %v723 = vsub.f32 1.0, %v722
    %v724 = vmul.f32 %v721, %v723
    %v725 = vadd.f32 %v721, %v724
    %vm726 = vweird.f32 %v720
    %vm727 = vweird.f32 %v721
    %vm728 = vmor %vm726, %vm727
    %v729 = vsel %vm728, %v721, %v725
    %v730 = vand.u32 2147483647, %v720
    %vm731 = vcmp.eq.f32.partialorder %v730, 8.507059e+37
    %v732 = vand.u32 %v720, 2147483648
    %v733 = vor.u32 1.1754944e-38, %v732
    %v734 = vsel %vm731, %v733, %v729
    %v735 = vmul.f32 1.0, %v734
    %v736 = vtanh.pop %v678
    %v737 = vmul.f32 %v735, %v615
    %739 = vrot.lane.b32.xlu0 %v736, 64
    %v740 = vpop.permute.xlu0 %739
    %v742 = vmul.f32 %v735, %v740
    %744 = vrot.lane.b32.xlu0 %v742, 32
    %v745 = vpop.permute.xlu0 %744
    %v747 = vadd.f32 %v737, %v745
    %v748 = vtanh.pop %v747
    %750 = vrot.lane.b32.xlu0 %v748, 64
    %v751 = vpop.permute.xlu0 %750
    %v753 = vmul.f32 %v735, %v751
    %755 = vrot.lane.b32.xlu0 %v199, 8
    %v756 = vpop.permute.xlu0 %755
    %759 = vrot.lane.b32.xlu0 %v716, 48
    %v760 = vpop.permute.xlu0 %759
    %763 = vrot.lane.b32.xlu0 %v753, 80
    %v764 = vpop.permute.xlu0 %763
    %v766 = vsel %vm229, %v200, %v756
    %v767 = vsel %vm231, %v766, %v760
    %v768 = vsel %vm233, %v767, %v764
    %v770 = vsel %vm240, %v768, 0
    %772 = vmatpush.msra.mxu0 0.0
    %773 = vmatpush.msra.mxu0 0.0
    %774 = vmatpush.msra.mxu0 0.0
    %775 = vmatpush.msra.mxu0 0.0
    %776 = vmatpush.msra.mxu0 0.0
    %777 = vmatpush.msra.mxu0 0.0
    %778 = vmatpush.msra.mxu0 %v222
    %779 = vmatpush.msra.mxu0 %v220
    %780 = vmatpush.msra.mxu0 %v218
    %781 = vmatpush.msra.mxu0 %v216
    %782 = vmatpush.msra.mxu0 %v214
    %783 = vmatpush.msra.mxu0 %v212
    %784 = vmatpush.msra.mxu0 %v210
    %785 = vmatpush.msra.mxu0 %v208
    %786 = vmatpush.msra.mxu0 %v206
    %787 = vmatpush.msra.mxu0 %v204
    %788 = vmatmul.f32.gmra.mxu0 %v770
    %v789 = vpop.f32.mrf.mxu0
    %v790 = vadd.f32 %v236, %v789
    %791 = vdwg.mxu0
    %792 = vmatpush.msra.mxu0 0.0
    %793 = vmatpush.msra.mxu0 0.0
    %794 = vmatpush.msra.mxu0 0.0
    %795 = vmatpush.msra.mxu0 0.0
    %796 = vmatpush.msra.mxu0 0.0
    %797 = vmatpush.msra.mxu0 0.0
    %798 = vmatpush.msra.mxu0 %v223
    %799 = vmatpush.msra.mxu0 %v221
    %800 = vmatpush.msra.mxu0 %v219
    %801 = vmatpush.msra.mxu0 %v217
    %802 = vmatpush.msra.mxu0 %v215
    %803 = vmatpush.msra.mxu0 %v213
    %804 = vmatpush.msra.mxu0 %v211
    %805 = vmatpush.msra.mxu0 %v209
    %806 = vmatpush.msra.mxu0 %v207
    %807 = vmatpush.msra.mxu0 %v205
    %808 = vmatmul.f32.gmra.mxu0 %v770
    %v809 = vpop.f32.mrf.mxu0
    %v810 = vadd.f32 %v237, %v809
    %811 = vdwg.mxu0
    %v812 = vxor.u32 %v790, 2147483648
    %v813 = vmul.f32 %v812, 1.442695
    %v814 = vpow.pop %v813
    %v815 = vadd.f32 %v814, 1.0
    %v816 = vrcp.pop %v815
    %v817 = vmul.f32 %v815, %v816
    %v818 = vsub.f32 1.0, %v817
    %v819 = vmul.f32 %v816, %v818
    %v820 = vadd.f32 %v816, %v819
    %vm821 = vweird.f32 %v815
    %vm822 = vweird.f32 %v816
    %vm823 = vmor %vm821, %vm822
    %v824 = vsel %vm823, %v816, %v820
    %v825 = vand.u32 2147483647, %v815
    %vm826 = vcmp.eq.f32.partialorder %v825, 8.507059e+37
    %v827 = vand.u32 %v815, 2147483648
    %v828 = vor.u32 1.1754944e-38, %v827
    %v829 = vsel %vm826, %v828, %v824
    %v830 = vmul.f32 1.0, %v829
    %v831 = vtanh.pop %v790
    %v832 = vmul.f32 %v830, %v710
    %834 = vrot.lane.b32.xlu0 %v831, 64
    %v835 = vpop.permute.xlu0 %834
    %v837 = vmul.f32 %v830, %v835
    %839 = vrot.lane.b32.xlu0 %v837, 32
    %v840 = vpop.permute.xlu0 %839
    %v842 = vadd.f32 %v832, %v840
    %v843 = vtanh.pop %v842
    %845 = vrot.lane.b32.xlu0 %v843, 64
    %v846 = vpop.permute.xlu0 %845
    %v848 = vmul.f32 %v830, %v846
    %v849 = vxor.u32 %v810, 2147483648
    %v850 = vmul.f32 %v849, 1.442695
    %v851 = vpow.pop %v850
    %v852 = vadd.f32 %v851, 1.0
    %v853 = vrcp.pop %v852
    %v854 = vmul.f32 %v852, %v853
    %v855 = vsub.f32 1.0, %v854
    %v856 = vmul.f32 %v853, %v855
    %v857 = vadd.f32 %v853, %v856
    %vm858 = vweird.f32 %v852
    %vm859 = vweird.f32 %v853
    %vm860 = vmor %vm858, %vm859
    %v861 = vsel %vm860, %v853, %v857
    %v862 = vand.u32 2147483647, %v852
    %vm863 = vcmp.eq.f32.partialorder %v862, 8.507059e+37
    %v864 = vand.u32 %v852, 2147483648
    %v865 = vor.u32 1.1754944e-38, %v864
    %v866 = vsel %vm863, %v865, %v861
    %v867 = vmul.f32 1.0, %v866
    %v868 = vtanh.pop %v810
    %v869 = vmul.f32 %v867, %v747
    %871 = vrot.lane.b32.xlu0 %v868, 64
    %v872 = vpop.permute.xlu0 %871
    %v874 = vmul.f32 %v867, %v872
    %876 = vrot.lane.b32.xlu0 %v874, 32
    %v877 = vpop.permute.xlu0 %876
    %v879 = vadd.f32 %v869, %v877
    %v880 = vtanh.pop %v879
    %882 = vrot.lane.b32.xlu0 %v880, 64
    %v883 = vpop.permute.xlu0 %882
    %v885 = vmul.f32 %v867, %v883
    %887 = vrot.lane.b32.xlu0 %v198, 8
    %v888 = vpop.permute.xlu0 %887
    %891 = vrot.lane.b32.xlu0 %v848, 48
    %v892 = vpop.permute.xlu0 %891
    %895 = vrot.lane.b32.xlu0 %v885, 80
    %v896 = vpop.permute.xlu0 %895
    %v898 = vsel %vm229, %v201, %v888
    %v899 = vsel %vm231, %v898, %v892
    %v900 = vsel %vm233, %v899, %v896
    %v902 = vsel %vm240, %v900, 0
    %904 = vmatpush.msra.mxu0 0.0
    %905 = vmatpush.msra.mxu0 0.0
    %906 = vmatpush.msra.mxu0 0.0
    %907 = vmatpush.msra.mxu0 0.0
    %908 = vmatpush.msra.mxu0 0.0
    %909 = vmatpush.msra.mxu0 0.0
    %910 = vmatpush.msra.mxu0 %v222
    %911 = vmatpush.msra.mxu0 %v220
    %912 = vmatpush.msra.mxu0 %v218
    %913 = vmatpush.msra.mxu0 %v216
    %914 = vmatpush.msra.mxu0 %v214
    %915 = vmatpush.msra.mxu0 %v212
    %916 = vmatpush.msra.mxu0 %v210
    %917 = vmatpush.msra.mxu0 %v208
    %918 = vmatpush.msra.mxu0 %v206
    %919 = vmatpush.msra.mxu0 %v204
    %920 = vmatmul.f32.gmra.mxu0 %v902
    %v921 = vpop.f32.mrf.mxu0
    %v922 = vadd.f32 %v236, %v921
    %923 = vdwg.mxu0
    %924 = vmatpush.msra.mxu0 0.0
    %925 = vmatpush.msra.mxu0 0.0
    %926 = vmatpush.msra.mxu0 0.0
    %927 = vmatpush.msra.mxu0 0.0
    %928 = vmatpush.msra.mxu0 0.0
    %929 = vmatpush.msra.mxu0 0.0
    %930 = vmatpush.msra.mxu0 %v223
    %931 = vmatpush.msra.mxu0 %v221
    %932 = vmatpush.msra.mxu0 %v219
    %933 = vmatpush.msra.mxu0 %v217
    %934 = vmatpush.msra.mxu0 %v215
    %935 = vmatpush.msra.mxu0 %v213
    %936 = vmatpush.msra.mxu0 %v211
    %937 = vmatpush.msra.mxu0 %v209
    %938 = vmatpush.msra.mxu0 %v207
    %939 = vmatpush.msra.mxu0 %v205
    %940 = vmatmul.f32.gmra.mxu0 %v902
    %v941 = vpop.f32.mrf.mxu0
    %v942 = vadd.f32 %v237, %v941
    %943 = vdwg.mxu0
    %v944 = vxor.u32 %v922, 2147483648
    %v945 = vmul.f32 %v944, 1.442695
    %v946 = vpow.pop %v945
    %v947 = vadd.f32 %v946, 1.0
    %v948 = vrcp.pop %v947
    %v949 = vmul.f32 %v947, %v948
    %v950 = vsub.f32 1.0, %v949
    %v951 = vmul.f32 %v948, %v950
    %v952 = vadd.f32 %v948, %v951
    %vm953 = vweird.f32 %v947
    %vm954 = vweird.f32 %v948
    %vm955 = vmor %vm953, %vm954
    %v956 = vsel %vm955, %v948, %v952
    %v957 = vand.u32 2147483647, %v947
    %vm958 = vcmp.eq.f32.partialorder %v957, 8.507059e+37
    %v959 = vand.u32 %v947, 2147483648
    %v960 = vor.u32 1.1754944e-38, %v959
    %v961 = vsel %vm958, %v960, %v956
    %v962 = vmul.f32 1.0, %v961
    %v963 = vtanh.pop %v922
    %v964 = vmul.f32 %v962, %v842
    %966 = vrot.lane.b32.xlu0 %v963, 64
    %v967 = vpop.permute.xlu0 %966
    %v969 = vmul.f32 %v962, %v967
    %971 = vrot.lane.b32.xlu0 %v969, 32
    %v972 = vpop.permute.xlu0 %971
    %v974 = vadd.f32 %v964, %v972
    %v975 = vtanh.pop %v974
    %977 = vrot.lane.b32.xlu0 %v975, 64
    %v978 = vpop.permute.xlu0 %977
    %v980 = vmul.f32 %v962, %v978
    %v981 = vxor.u32 %v942, 2147483648
    %v982 = vmul.f32 %v981, 1.442695
    %v983 = vpow.pop %v982
    %v984 = vadd.f32 %v983, 1.0
    %v985 = vrcp.pop %v984
    %v986 = vmul.f32 %v984, %v985
    %v987 = vsub.f32 1.0, %v986
    %v988 = vmul.f32 %v985, %v987
    %v989 = vadd.f32 %v985, %v988
    %vm990 = vweird.f32 %v984
    %vm991 = vweird.f32 %v985
    %vm992 = vmor %vm990, %vm991
    %v993 = vsel %vm992, %v985, %v989
    %v994 = vand.u32 2147483647, %v984
    %vm995 = vcmp.eq.f32.partialorder %v994, 8.507059e+37
    %v996 = vand.u32 %v984, 2147483648
    %v997 = vor.u32 1.1754944e-38, %v996
    %v998 = vsel %vm995, %v997, %v993
    %v999 = vmul.f32 1.0, %v998
    %v1000 = vtanh.pop %v942
    %v1001 = vmul.f32 %v999, %v879
    %1003 = vrot.lane.b32.xlu0 %v1000, 64
    %v1004 = vpop.permute.xlu0 %1003
    %v1006 = vmul.f32 %v999, %v1004
    %1008 = vrot.lane.b32.xlu0 %v1006, 32
    %v1009 = vpop.permute.xlu0 %1008
    %v1011 = vadd.f32 %v1001, %v1009
    %v1012 = vtanh.pop %v1011
    %1014 = vrot.lane.b32.xlu0 %v1012, 64
    %v1015 = vpop.permute.xlu0 %1014
    %v1017 = vmul.f32 %v999, %v1015
    %1019 = vrot.lane.b32.xlu0 %v197, 8
    %v1020 = vpop.permute.xlu0 %1019
    %1023 = vrot.lane.b32.xlu0 %v980, 48
    %v1024 = vpop.permute.xlu0 %1023
    %1027 = vrot.lane.b32.xlu0 %v1017, 80
    %v1028 = vpop.permute.xlu0 %1027
    %v1030 = vsel %vm229, %v202, %v1020
    %v1031 = vsel %vm231, %v1030, %v1024
    %v1032 = vsel %vm233, %v1031, %v1028
    %v1034 = vsel %vm240, %v1032, 0
    %1036 = vmatpush.msra.mxu0 0.0
    %1037 = vmatpush.msra.mxu0 0.0
    %1038 = vmatpush.msra.mxu0 0.0
    %1039 = vmatpush.msra.mxu0 0.0
    %1040 = vmatpush.msra.mxu0 0.0
    %1041 = vmatpush.msra.mxu0 0.0
    %1042 = vmatpush.msra.mxu0 %v222
    %1043 = vmatpush.msra.mxu0 %v220
    %1044 = vmatpush.msra.mxu0 %v218
    %1045 = vmatpush.msra.mxu0 %v216
    %1046 = vmatpush.msra.mxu0 %v214
    %1047 = vmatpush.msra.mxu0 %v212
    %1048 = vmatpush.msra.mxu0 %v210
    %1049 = vmatpush.msra.mxu0 %v208
    %1050 = vmatpush.msra.mxu0 %v206
    %1051 = vmatpush.msra.mxu0 %v204
    %1052 = vmatmul.f32.gmra.mxu0 %v1034
    %v1053 = vpop.f32.mrf.mxu0
    %v1054 = vadd.f32 %v236, %v1053
    %1055 = vdwg.mxu0
    %1056 = vmatpush.msra.mxu0 0.0
    %1057 = vmatpush.msra.mxu0 0.0
    %1058 = vmatpush.msra.mxu0 0.0
    %1059 = vmatpush.msra.mxu0 0.0
    %1060 = vmatpush.msra.mxu0 0.0
    %1061 = vmatpush.msra.mxu0 0.0
    %1062 = vmatpush.msra.mxu0 %v223
    %1063 = vmatpush.msra.mxu0 %v221
    %1064 = vmatpush.msra.mxu0 %v219
    %1065 = vmatpush.msra.mxu0 %v217
    %1066 = vmatpush.msra.mxu0 %v215
    %1067 = vmatpush.msra.mxu0 %v213
    %1068 = vmatpush.msra.mxu0 %v211
    %1069 = vmatpush.msra.mxu0 %v209
    %1070 = vmatpush.msra.mxu0 %v207
    %1071 = vmatpush.msra.mxu0 %v205
    %1072 = vmatmul.f32.gmra.mxu0 %v1034
    %v1073 = vpop.f32.mrf.mxu0
    %v1074 = vadd.f32 %v237, %v1073
    %1075 = vdwg.mxu0
    %v1076 = vxor.u32 %v1054, 2147483648
    %v1077 = vmul.f32 %v1076, 1.442695
    %v1078 = vpow.pop %v1077
    %v1079 = vadd.f32 %v1078, 1.0
    %v1080 = vrcp.pop %v1079
    %v1081 = vmul.f32 %v1079, %v1080
    %v1082 = vsub.f32 1.0, %v1081
    %v1083 = vmul.f32 %v1080, %v1082
    %v1084 = vadd.f32 %v1080, %v1083
    %vm1085 = vweird.f32 %v1079
    %vm1086 = vweird.f32 %v1080
    %vm1087 = vmor %vm1085, %vm1086
    %v1088 = vsel %vm1087, %v1080, %v1084
    %v1089 = vand.u32 2147483647, %v1079
    %vm1090 = vcmp.eq.f32.partialorder %v1089, 8.507059e+37
    %v1091 = vand.u32 %v1079, 2147483648
    %v1092 = vor.u32 1.1754944e-38, %v1091
    %v1093 = vsel %vm1090, %v1092, %v1088
    %v1094 = vmul.f32 1.0, %v1093
    %v1095 = vtanh.pop %v1054
    %v1096 = vmul.f32 %v1094, %v974
    %1098 = vrot.lane.b32.xlu0 %v1095, 64
    %v1099 = vpop.permute.xlu0 %1098
    %v1101 = vmul.f32 %v1094, %v1099
    %1103 = vrot.lane.b32.xlu0 %v1101, 32
    %v1104 = vpop.permute.xlu0 %1103
    %v1106 = vadd.f32 %v1096, %v1104
    %v1107 = vtanh.pop %v1106
    %1109 = vrot.lane.b32.xlu0 %v1107, 64
    %v1110 = vpop.permute.xlu0 %1109
    %v1112 = vmul.f32 %v1094, %v1110
    %v1113 = vxor.u32 %v1074, 2147483648
    %v1114 = vmul.f32 %v1113, 1.442695
    %v1115 = vpow.pop %v1114
    %v1116 = vadd.f32 %v1115, 1.0
    %v1117 = vrcp.pop %v1116
    %v1118 = vmul.f32 %v1116, %v1117
    %v1119 = vsub.f32 1.0, %v1118
    %v1120 = vmul.f32 %v1117, %v1119
    %v1121 = vadd.f32 %v1117, %v1120
    %vm1122 = vweird.f32 %v1116
    %vm1123 = vweird.f32 %v1117
    %vm1124 = vmor %vm1122, %vm1123
    %v1125 = vsel %vm1124, %v1117, %v1121
    %v1126 = vand.u32 2147483647, %v1116
    %vm1127 = vcmp.eq.f32.partialorder %v1126, 8.507059e+37
    %v1128 = vand.u32 %v1116, 2147483648
    %v1129 = vor.u32 1.1754944e-38, %v1128
    %v1130 = vsel %vm1127, %v1129, %v1125
    %v1131 = vmul.f32 1.0, %v1130
    %v1132 = vtanh.pop %v1074
    %v1133 = vmul.f32 %v1131, %v1011
    %1135 = vrot.lane.b32.xlu0 %v1132, 64
    %v1136 = vpop.permute.xlu0 %1135
    %v1138 = vmul.f32 %v1131, %v1136
    %1140 = vrot.lane.b32.xlu0 %v1138, 32
    %v1141 = vpop.permute.xlu0 %1140
    %v1143 = vadd.f32 %v1133, %v1141
    %v1144 = vtanh.pop %v1143
    %1146 = vrot.lane.b32.xlu0 %v1144, 64
    %v1147 = vpop.permute.xlu0 %1146
    %v1149 = vmul.f32 %v1131, %v1147
    %1151 = vrot.lane.b32.xlu0 %v196, 8
    %v1152 = vpop.permute.xlu0 %1151
    %1155 = vrot.lane.b32.xlu0 %v1112, 48
    %v1156 = vpop.permute.xlu0 %1155
    %1159 = vrot.lane.b32.xlu0 %v1149, 80
    %v1160 = vpop.permute.xlu0 %1159
    %v1162 = vsel %vm229, %v203, %v1152
    %v1163 = vsel %vm231, %v1162, %v1156
    %v1164 = vsel %vm233, %v1163, %v1160
    %v1166 = vsel %vm240, %v1164, 0
    %1168 = vmatpush.msra.mxu0 0.0
    %1169 = vmatpush.msra.mxu0 0.0
    %1170 = vmatpush.msra.mxu0 0.0
    %1171 = vmatpush.msra.mxu0 0.0
    %1172 = vmatpush.msra.mxu0 0.0
    %1173 = vmatpush.msra.mxu0 0.0
    %1174 = vmatpush.msra.mxu0 %v222
    %1175 = vmatpush.msra.mxu0 %v220
    %1176 = vmatpush.msra.mxu0 %v218
    %1177 = vmatpush.msra.mxu0 %v216
    %1178 = vmatpush.msra.mxu0 %v214
    %1179 = vmatpush.msra.mxu0 %v212
    %1180 = vmatpush.msra.mxu0 %v210
    %1181 = vmatpush.msra.mxu0 %v208
    %1182 = vmatpush.msra.mxu0 %v206
    %1183 = vmatpush.msra.mxu0 %v204
    %1184 = vmatmul.f32.gmra.mxu0 %v1166
    %v1185 = vpop.f32.mrf.mxu0
    %v1186 = vadd.f32 %v236, %v1185
    %1187 = vdwg.mxu0
    %1188 = vmatpush.msra.mxu0 0.0
    %1189 = vmatpush.msra.mxu0 0.0
    %1190 = vmatpush.msra.mxu0 0.0
    %1191 = vmatpush.msra.mxu0 0.0
    %1192 = vmatpush.msra.mxu0 0.0
    %1193 = vmatpush.msra.mxu0 0.0
    %1194 = vmatpush.msra.mxu0 %v223
    %1195 = vmatpush.msra.mxu0 %v221
    %1196 = vmatpush.msra.mxu0 %v219
    %1197 = vmatpush.msra.mxu0 %v217
    %1198 = vmatpush.msra.mxu0 %v215
    %1199 = vmatpush.msra.mxu0 %v213
    %1200 = vmatpush.msra.mxu0 %v211
    %1201 = vmatpush.msra.mxu0 %v209
    %1202 = vmatpush.msra.mxu0 %v207
    %1203 = vmatpush.msra.mxu0 %v205
    %1204 = vmatmul.f32.gmra.mxu0 %v1166
    %v1205 = vpop.f32.mrf.mxu0
    %v1206 = vadd.f32 %v237, %v1205
    %1207 = vdwg.mxu0
    %v1208 = vxor.u32 %v1186, 2147483648
    %v1209 = vmul.f32 %v1208, 1.442695
    %v1210 = vpow.pop %v1209
    %v1211 = vadd.f32 %v1210, 1.0
    %v1212 = vrcp.pop %v1211
    %v1213 = vmul.f32 %v1211, %v1212
    %v1214 = vsub.f32 1.0, %v1213
    %v1215 = vmul.f32 %v1212, %v1214
    %v1216 = vadd.f32 %v1212, %v1215
    %vm1217 = vweird.f32 %v1211
    %vm1218 = vweird.f32 %v1212
    %vm1219 = vmor %vm1217, %vm1218
    %v1220 = vsel %vm1219, %v1212, %v1216
    %v1221 = vand.u32 2147483647, %v1211
    %vm1222 = vcmp.eq.f32.partialorder %v1221, 8.507059e+37
    %v1223 = vand.u32 %v1211, 2147483648
    %v1224 = vor.u32 1.1754944e-38, %v1223
    %v1225 = vsel %vm1222, %v1224, %v1220
    %v1226 = vmul.f32 1.0, %v1225
    %v1227 = vtanh.pop %v1186
    %v1228 = vmul.f32 %v1226, %v1106
    %1230 = vrot.lane.b32.xlu0 %v1227, 64
    %v1231 = vpop.permute.xlu0 %1230
    %v1233 = vmul.f32 %v1226, %v1231
    %1235 = vrot.lane.b32.xlu0 %v1233, 32
    %v1236 = vpop.permute.xlu0 %1235
    %v1238 = vadd.f32 %v1228, %v1236
    %v1239 = vtanh.pop %v1238
    %1241 = vrot.lane.b32.xlu0 %v1239, 64
    %v1242 = vpop.permute.xlu0 %1241
    %v1244 = vmul.f32 %v1226, %v1242
    %v1245 = vxor.u32 %v1206, 2147483648
    %v1246 = vmul.f32 %v1245, 1.442695
    %v1247 = vpow.pop %v1246
    %v1248 = vadd.f32 %v1247, 1.0
    %v1249 = vrcp.pop %v1248
    %v1250 = vmul.f32 %v1248, %v1249
    %v1251 = vsub.f32 1.0, %v1250
    %v1252 = vmul.f32 %v1249, %v1251
    %v1253 = vadd.f32 %v1249, %v1252
    %vm1254 = vweird.f32 %v1248
    %vm1255 = vweird.f32 %v1249
    %vm1256 = vmor %vm1254, %vm1255
    %v1257 = vsel %vm1256, %v1249, %v1253
    %v1258 = vand.u32 2147483647, %v1248
    %vm1259 = vcmp.eq.f32.partialorder %v1258, 8.507059e+37
    %v1260 = vand.u32 %v1248, 2147483648
    %v1261 = vor.u32 1.1754944e-38, %v1260
    %v1262 = vsel %vm1259, %v1261, %v1257
    %v1263 = vmul.f32 1.0, %v1262
    %v1264 = vtanh.pop %v1206
    %v1265 = vmul.f32 %v1263, %v1143
    %1267 = vrot.lane.b32.xlu0 %v1264, 64
    %v1268 = vpop.permute.xlu0 %1267
    %v1270 = vmul.f32 %v1263, %v1268
    %1272 = vrot.lane.b32.xlu0 %v1270, 32
    %v1273 = vpop.permute.xlu0 %1272
    %v1275 = vadd.f32 %v1265, %v1273
    %v1276 = vtanh.pop %v1275
    %1278 = vrot.lane.b32.xlu0 %v1276, 64
    %v1279 = vpop.permute.xlu0 %1278
    %v1281 = vmul.f32 %v1263, %v1279
    %v1282 = vadd.f32 %v320, %v1281
    %v1283 = vadd.f32 %v452, %v1149
    %v1284 = vadd.f32 %v584, %v1017
    %v1285 = vadd.f32 %v716, %v885
    %v1286 = vadd.f32 %v848, %v753
    %v1287 = vadd.f32 %v980, %v621
    %v1288 = vadd.f32 %v1112, %v489
    %v1289 = vadd.f32 %v1244, %v357
    %v1290 = vld [vmem:[#allocation8] sm:$0xff]
    %v1291 = vld [vmem:[#allocation8 + $0x8] sm:$0xff]
    %v1292 = vld [vmem:[#allocation8 + $0x10] sm:$0xff]
    %v1293 = vld [vmem:[#allocation8 + $0x18] sm:$0xff]
    %v1294 = vld [vmem:[#allocation10] sm:$0x1]
    %v1296 = vperm.slane %v1294, 0
    %1299 = vrot.lane.b32.xlu0 %v1282, 32
    %v1300 = vpop.permute.xlu0 %1299
    %vm1301 = vcmask 261120
    %v1302 = vsel %vm1301, %v1300, 0
    %1304 = vmatpush.msra.mxu0 0.0
    %1305 = vmatpush.msra.mxu0 0.0
    %1306 = vmatpush.msra.mxu0 0.0
    %1307 = vmatpush.msra.mxu0 0.0
    %1308 = vmatpush.msra.mxu0 0.0
    %1309 = vmatpush.msra.mxu0 0.0
    %1310 = vmatpush.msra.mxu0 0.0
    %1311 = vmatpush.msra.mxu0 0.0
    %1312 = vmatpush.msra.mxu0 0.0
    %1313 = vmatpush.msra.mxu0 0.0
    %1314 = vmatpush.msra.mxu0 0.0
    %1315 = vmatpush.msra.mxu0 0.0
    %1316 = vmatpush.msra.mxu0 %v1293
    %1317 = vmatpush.msra.mxu0 %v1292
    %1318 = vmatpush.msra.mxu0 %v1291
    %1319 = vmatpush.msra.mxu0 %v1290
    %1320 = vmatmul.f32.gmra.mxu0 %v1302
    %v1321 = vpop.f32.mrf.mxu0
    %v1322 = vadd.f32 %v1296, %v1321
    %1323 = vdwg.mxu0
    %1325 = vrot.lane.b32.xlu0 %v1283, 32
    %v1326 = vpop.permute.xlu0 %1325
    %v1327 = vsel %vm1301, %v1326, 0
    %1329 = vmatpush.msra.mxu0 0.0
    %1330 = vmatpush.msra.mxu0 0.0
    %1331 = vmatpush.msra.mxu0 0.0
    %1332 = vmatpush.msra.mxu0 0.0
    %1333 = vmatpush.msra.mxu0 0.0
    %1334 = vmatpush.msra.mxu0 0.0
    %1335 = vmatpush.msra.mxu0 0.0
    %1336 = vmatpush.msra.mxu0 0.0
    %1337 = vmatpush.msra.mxu0 0.0
    %1338 = vmatpush.msra.mxu0 0.0
    %1339 = vmatpush.msra.mxu0 0.0
    %1340 = vmatpush.msra.mxu0 0.0
    %1341 = vmatpush.msra.mxu0 %v1293
    %1342 = vmatpush.msra.mxu0 %v1292
    %1343 = vmatpush.msra.mxu0 %v1291
    %1344 = vmatpush.msra.mxu0 %v1290
    %1345 = vmatmul.f32.gmra.mxu0 %v1327
    %v1346 = vpop.f32.mrf.mxu0
    %v1347 = vadd.f32 %v1296, %v1346
    %1348 = vdwg.mxu0
    %1350 = vrot.lane.b32.xlu0 %v1284, 32
    %v1351 = vpop.permute.xlu0 %1350
    %v1352 = vsel %vm1301, %v1351, 0
    %1354 = vmatpush.msra.mxu0 0.0
    %1355 = vmatpush.msra.mxu0 0.0
    %1356 = vmatpush.msra.mxu0 0.0
    %1357 = vmatpush.msra.mxu0 0.0
    %1358 = vmatpush.msra.mxu0 0.0
    %1359 = vmatpush.msra.mxu0 0.0
    %1360 = vmatpush.msra.mxu0 0.0
    %1361 = vmatpush.msra.mxu0 0.0
    %1362 = vmatpush.msra.mxu0 0.0
    %1363 = vmatpush.msra.mxu0 0.0
    %1364 = vmatpush.msra.mxu0 0.0
    %1365 = vmatpush.msra.mxu0 0.0
    %1366 = vmatpush.msra.mxu0 %v1293
    %1367 = vmatpush.msra.mxu0 %v1292
    %1368 = vmatpush.msra.mxu0 %v1291
    %1369 = vmatpush.msra.mxu0 %v1290
    %1370 = vmatmul.f32.gmra.mxu0 %v1352
    %v1371 = vpop.f32.mrf.mxu0
    %v1372 = vadd.f32 %v1296, %v1371
    %1373 = vdwg.mxu0
    %1375 = vrot.lane.b32.xlu0 %v1285, 32
    %v1376 = vpop.permute.xlu0 %1375
    %v1377 = vsel %vm1301, %v1376, 0
    %1379 = vmatpush.msra.mxu0 0.0
    %1380 = vmatpush.msra.mxu0 0.0
    %1381 = vmatpush.msra.mxu0 0.0
    %1382 = vmatpush.msra.mxu0 0.0
    %1383 = vmatpush.msra.mxu0 0.0
    %1384 = vmatpush.msra.mxu0 0.0
    %1385 = vmatpush.msra.mxu0 0.0
    %1386 = vmatpush.msra.mxu0 0.0
    %1387 = vmatpush.msra.mxu0 0.0
    %1388 = vmatpush.msra.mxu0 0.0
    %1389 = vmatpush.msra.mxu0 0.0
    %1390 = vmatpush.msra.mxu0 0.0
    %1391 = vmatpush.msra.mxu0 %v1293
    %1392 = vmatpush.msra.mxu0 %v1292
    %1393 = vmatpush.msra.mxu0 %v1291
    %1394 = vmatpush.msra.mxu0 %v1290
    %1395 = vmatmul.f32.gmra.mxu0 %v1377
    %v1396 = vpop.f32.mrf.mxu0
    %v1397 = vadd.f32 %v1296, %v1396
    %1398 = vdwg.mxu0
    %1400 = vrot.lane.b32.xlu0 %v1286, 32
    %v1401 = vpop.permute.xlu0 %1400
    %v1402 = vsel %vm1301, %v1401, 0
    %1404 = vmatpush.msra.mxu0 0.0
    %1405 = vmatpush.msra.mxu0 0.0
    %1406 = vmatpush.msra.mxu0 0.0
    %1407 = vmatpush.msra.mxu0 0.0
    %1408 = vmatpush.msra.mxu0 0.0
    %1409 = vmatpush.msra.mxu0 0.0
    %1410 = vmatpush.msra.mxu0 0.0
    %1411 = vmatpush.msra.mxu0 0.0
    %1412 = vmatpush.msra.mxu0 0.0
    %1413 = vmatpush.msra.mxu0 0.0
    %1414 = vmatpush.msra.mxu0 0.0
    %1415 = vmatpush.msra.mxu0 0.0
    %1416 = vmatpush.msra.mxu0 %v1293
    %1417 = vmatpush.msra.mxu0 %v1292
    %1418 = vmatpush.msra.mxu0 %v1291
    %1419 = vmatpush.msra.mxu0 %v1290
    %1420 = vmatmul.f32.gmra.mxu0 %v1402
    %v1421 = vpop.f32.mrf.mxu0
    %v1422 = vadd.f32 %v1296, %v1421
    %1423 = vdwg.mxu0
    %1425 = vrot.lane.b32.xlu0 %v1287, 32
    %v1426 = vpop.permute.xlu0 %1425
    %v1427 = vsel %vm1301, %v1426, 0
    %1429 = vmatpush.msra.mxu0 0.0
    %1430 = vmatpush.msra.mxu0 0.0
    %1431 = vmatpush.msra.mxu0 0.0
    %1432 = vmatpush.msra.mxu0 0.0
    %1433 = vmatpush.msra.mxu0 0.0
    %1434 = vmatpush.msra.mxu0 0.0
    %1435 = vmatpush.msra.mxu0 0.0
    %1436 = vmatpush.msra.mxu0 0.0
    %1437 = vmatpush.msra.mxu0 0.0
    %1438 = vmatpush.msra.mxu0 0.0
    %1439 = vmatpush.msra.mxu0 0.0
    %1440 = vmatpush.msra.mxu0 0.0
    %1441 = vmatpush.msra.mxu0 %v1293
    %1442 = vmatpush.msra.mxu0 %v1292
    %1443 = vmatpush.msra.mxu0 %v1291
    %1444 = vmatpush.msra.mxu0 %v1290
    %1445 = vmatmul.f32.gmra.mxu0 %v1427
    %v1446 = vpop.f32.mrf.mxu0
    %v1447 = vadd.f32 %v1296, %v1446
    %1448 = vdwg.mxu0
    %1450 = vrot.lane.b32.xlu0 %v1288, 32
    %v1451 = vpop.permute.xlu0 %1450
    %v1452 = vsel %vm1301, %v1451, 0
    %1454 = vmatpush.msra.mxu0 0.0
    %1455 = vmatpush.msra.mxu0 0.0
    %1456 = vmatpush.msra.mxu0 0.0
    %1457 = vmatpush.msra.mxu0 0.0
    %1458 = vmatpush.msra.mxu0 0.0
    %1459 = vmatpush.msra.mxu0 0.0
    %1460 = vmatpush.msra.mxu0 0.0
    %1461 = vmatpush.msra.mxu0 0.0
    %1462 = vmatpush.msra.mxu0 0.0
    %1463 = vmatpush.msra.mxu0 0.0
    %1464 = vmatpush.msra.mxu0 0.0
    %1465 = vmatpush.msra.mxu0 0.0
    %1466 = vmatpush.msra.mxu0 %v1293
    %1467 = vmatpush.msra.mxu0 %v1292
    %1468 = vmatpush.msra.mxu0 %v1291
    %1469 = vmatpush.msra.mxu0 %v1290
    %1470 = vmatmul.f32.gmra.mxu0 %v1452
    %v1471 = vpop.f32.mrf.mxu0
    %v1472 = vadd.f32 %v1296, %v1471
    %1473 = vdwg.mxu0
    %1475 = vrot.lane.b32.xlu0 %v1289, 32
    %v1476 = vpop.permute.xlu0 %1475
    %v1477 = vsel %vm1301, %v1476, 0
    %1479 = vmatpush.msra.mxu0 0.0
    %1480 = vmatpush.msra.mxu0 0.0
    %1481 = vmatpush.msra.mxu0 0.0
    %1482 = vmatpush.msra.mxu0 0.0
    %1483 = vmatpush.msra.mxu0 0.0
    %1484 = vmatpush.msra.mxu0 0.0
    %1485 = vmatpush.msra.mxu0 0.0
    %1486 = vmatpush.msra.mxu0 0.0
    %1487 = vmatpush.msra.mxu0 0.0
    %1488 = vmatpush.msra.mxu0 0.0
    %1489 = vmatpush.msra.mxu0 0.0
    %1490 = vmatpush.msra.mxu0 0.0
    %1491 = vmatpush.msra.mxu0 %v1293
    %1492 = vmatpush.msra.mxu0 %v1292
    %1493 = vmatpush.msra.mxu0 %v1291
    %1494 = vmatpush.msra.mxu0 %v1290
    %1495 = vmatmul.f32.gmra.mxu0 %v1477
    %v1496 = vpop.f32.mrf.mxu0
    %v1497 = vadd.f32 %v1296, %v1496
    %1498 = vdwg.mxu0
    %v1499 = vld [vmem:[#allocation11] sm:$0xff]
    %v1500 = vld [vmem:[#allocation11 + $0x8] sm:$0xff]
    %v1501 = vld [vmem:[#allocation11 + $0x10] sm:$0xff]
    %v1502 = vld [vmem:[#allocation11 + $0x18] sm:$0xff]
    %v1504 = vsel %vm1301, %v1497, 0
    %1506 = vmatpush.msra.mxu0 0.0
    %1507 = vmatpush.msra.mxu0 0.0
    %1508 = vmatpush.msra.mxu0 0.0
    %1509 = vmatpush.msra.mxu0 0.0
    %1510 = vmatpush.msra.mxu0 0.0
    %1511 = vmatpush.msra.mxu0 0.0
    %1512 = vmatpush.msra.mxu0 0.0
    %1513 = vmatpush.msra.mxu0 0.0
    %1514 = vmatpush.msra.mxu0 0.0
    %1515 = vmatpush.msra.mxu0 0.0
    %1516 = vmatpush.msra.mxu0 0.0
    %1517 = vmatpush.msra.mxu0 0.0
    %1518 = vmatpush.msra.mxu0 %v1502
    %1519 = vmatpush.msra.mxu0 %v1501
    %1520 = vmatpush.msra.mxu0 %v1500
    %1521 = vmatpush.msra.mxu0 %v1499
    %1522 = vmatmul.f32.gmra.mxu0 %v1504
    %v1523 = vpop.f32.mrf.mxu0
    %v1524 = vadd.f32 0.0, %v1523
    %1525 = vdwg.mxu0
    %v1526 = vld [vmem:[#allocation2] sm:$0x1]
    %v1527 = vmul.f32 %v1322, %v1524
    %vm1528 = vcmask 257024
    %v1529 = vsel %vm1528, %v1527, 0.0
    %1530 = vadd.xlane.f32.xlu0 %v1529
    %v1531 = vpop.xlane.xlu0 %1530
    %v1533 = vperm.slane %v1526, 0
    %v1535 = vadd.f32 %v1531, %v1533
    %v1536 = vmul.f32 %v1347, %v1524
    %v1537 = vsel %vm1528, %v1536, 0.0
    %1538 = vadd.xlane.f32.xlu0 %v1537
    %v1539 = vpop.xlane.xlu0 %1538
    %v1540 = vadd.f32 %v1539, %v1533
    %v1541 = vmul.f32 %v1372, %v1524
    %v1542 = vsel %vm1528, %v1541, 0.0
    %1543 = vadd.xlane.f32.xlu0 %v1542
    %v1544 = vpop.xlane.xlu0 %1543
    %v1545 = vadd.f32 %v1544, %v1533
    %v1546 = vmul.f32 %v1397, %v1524
    %v1547 = vsel %vm1528, %v1546, 0.0
    %1548 = vadd.xlane.f32.xlu0 %v1547
    %v1549 = vpop.xlane.xlu0 %1548
    %v1550 = vadd.f32 %v1549, %v1533
    %v1551 = vmul.f32 %v1422, %v1524
    %v1552 = vsel %vm1528, %v1551, 0.0
    %1553 = vadd.xlane.f32.xlu0 %v1552
    %v1554 = vpop.xlane.xlu0 %1553
    %v1555 = vadd.f32 %v1554, %v1533
    %v1556 = vmul.f32 %v1447, %v1524
    %v1557 = vsel %vm1528, %v1556, 0.0
    %1558 = vadd.xlane.f32.xlu0 %v1557
    %v1559 = vpop.xlane.xlu0 %1558
    %v1560 = vadd.f32 %v1559, %v1533
    %v1561 = vmul.f32 %v1472, %v1524
    %v1562 = vsel %vm1528, %v1561, 0.0
    %1563 = vadd.xlane.f32.xlu0 %v1562
    %v1564 = vpop.xlane.xlu0 %1563
    %v1565 = vadd.f32 %v1564, %v1533
    %v1566 = vmul.f32 %v1497, %v1524
    %v1567 = vsel %vm1528, %v1566, 0.0
    %1568 = vadd.xlane.f32.xlu0 %v1567
    %v1569 = vpop.xlane.xlu0 %1568
    %v1570 = vadd.f32 %v1569, %v1533
    %v1571 = vmax.f32 %v1535, %v1540
    %v1572 = vmax.f32 %v1571, %v1545
    %v1573 = vmax.f32 %v1572, %v1550
    %v1574 = vmax.f32 %v1573, %v1555
    %v1575 = vmax.f32 %v1574, %v1560
    %v1576 = vmax.f32 %v1575, %v1565
    %v1577 = vmax.f32 %v1576, %v1570
    %v1578 = vsub.f32 %v1535, %v1577
    %v1579 = vmul.f32 %v1578, 1.442695
    %v1580 = vpow.pop %v1579
    %v1581 = vsub.f32 %v1540, %v1577
    %v1582 = vmul.f32 %v1581, 1.442695
    %v1583 = vpow.pop %v1582
    %v1584 = vsub.f32 %v1545, %v1577
    %v1585 = vmul.f32 %v1584, 1.442695
    %v1586 = vpow.pop %v1585
    %v1587 = vsub.f32 %v1550, %v1577
    %v1588 = vmul.f32 %v1587, 1.442695
    %v1589 = vpow.pop %v1588
    %v1590 = vsub.f32 %v1555, %v1577
    %v1591 = vmul.f32 %v1590, 1.442695
    %v1592 = vpow.pop %v1591
    %v1593 = vsub.f32 %v1560, %v1577
    %v1594 = vmul.f32 %v1593, 1.442695
    %v1595 = vpow.pop %v1594
    %v1596 = vsub.f32 %v1565, %v1577
    %v1597 = vmul.f32 %v1596, 1.442695
    %v1598 = vpow.pop %v1597
    %v1599 = vsub.f32 %v1570, %v1577
    %v1600 = vmul.f32 %v1599, 1.442695
    %v1601 = vpow.pop %v1600
    %v1602 = vadd.f32 %v1580, %v1583
    %v1603 = vadd.f32 %v1602, %v1586
    %v1604 = vadd.f32 %v1603, %v1589
    %v1605 = vadd.f32 %v1604, %v1592
    %v1606 = vadd.f32 %v1605, %v1595
    %v1607 = vadd.f32 %v1606, %v1598
    %v1608 = vadd.f32 %v1607, %v1601
    %v1609 = vrcp.pop %v1608
    %v1610 = vmul.f32 %v1608, %v1609
    %v1611 = vsub.f32 1.0, %v1610
    %v1612 = vmul.f32 %v1609, %v1611
    %v1613 = vadd.f32 %v1609, %v1612
    %vm1614 = vweird.f32 %v1608
    %vm1615 = vweird.f32 %v1609
    %vm1616 = vmor %vm1614, %vm1615
    %v1617 = vsel %vm1616, %v1609, %v1613
    %v1618 = vand.u32 2147483647, %v1608
    %vm1619 = vcmp.eq.f32.partialorder %v1618, 8.507059e+37
    %v1620 = vand.u32 %v1608, 2147483648
    %v1621 = vor.u32 1.1754944e-38, %v1620
    %v1622 = vsel %vm1619, %v1621, %v1617
    %v1623 = vmul.f32 1.0, %v1622
    %v1624 = vmul.f32 %v1580, %v1623
    %1626 = vset.pattern.permute.xlu0 0
    %1627 = vperm.xlu0 %1626, %v1624
    %v1628 = vpop.permute.xlu0 %1627
    %v1630 = vmul.f32 %v1322, %v1628
    %v1631 = vmul.f32 %v1583, %v1623
    %1633 = vset.pattern.permute.xlu0 0
    %1634 = vperm.xlu0 %1633, %v1631
    %v1635 = vpop.permute.xlu0 %1634
    %v1637 = vmul.f32 %v1347, %v1635
    %v1638 = vadd.f32 %v1630, %v1637
    %v1639 = vmul.f32 %v1586, %v1623
    %1641 = vset.pattern.permute.xlu0 0
    %1642 = vperm.xlu0 %1641, %v1639
    %v1643 = vpop.permute.xlu0 %1642
    %v1645 = vmul.f32 %v1372, %v1643
    %v1646 = vadd.f32 %v1638, %v1645
    %v1647 = vmul.f32 %v1589, %v1623
    %1649 = vset.pattern.permute.xlu0 0
    %1650 = vperm.xlu0 %1649, %v1647
    %v1651 = vpop.permute.xlu0 %1650
    %v1653 = vmul.f32 %v1397, %v1651
    %v1654 = vadd.f32 %v1646, %v1653
    %v1655 = vmul.f32 %v1592, %v1623
    %1657 = vset.pattern.permute.xlu0 0
    %1658 = vperm.xlu0 %1657, %v1655
    %v1659 = vpop.permute.xlu0 %1658
    %v1661 = vmul.f32 %v1422, %v1659
    %v1662 = vadd.f32 %v1654, %v1661
    %v1663 = vmul.f32 %v1595, %v1623
    %1665 = vset.pattern.permute.xlu0 0
    %1666 = vperm.xlu0 %1665, %v1663
    %v1667 = vpop.permute.xlu0 %1666
    %v1669 = vmul.f32 %v1447, %v1667
    %v1670 = vadd.f32 %v1662, %v1669
    %v1671 = vmul.f32 %v1598, %v1623
    %1673 = vset.pattern.permute.xlu0 0
    %1674 = vperm.xlu0 %1673, %v1671
    %v1675 = vpop.permute.xlu0 %1674
    %v1677 = vmul.f32 %v1472, %v1675
    %v1678 = vadd.f32 %v1670, %v1677
    %v1679 = vmul.f32 %v1601, %v1623
    %1681 = vset.pattern.permute.xlu0 0
    %1682 = vperm.xlu0 %1681, %v1679
    %v1683 = vpop.permute.xlu0 %1682
    %v1685 = vmul.f32 %v1497, %v1683
    %v1686 = vadd.f32 %v1678, %v1685
    %v1687 = vlaneseq
    %v1688 = vshrl.u32 %v1687, 7
    %v1689 = vlaneseq
    %v1690 = vand.u32 %v1689, 127
    %s1691 = sld [smem:[#allocation3]]
    %s1692 = sld [smem:[#allocation3 + $0x80]]
    %v1693 = vstv %s1692
    %vm1694 = vcmp.eq.s32.totalorder %v1688, %v1693
    %v1695 = vstv %s1691
    %vm1696 = vcmp.eq.s32.totalorder %v1690, %v1695
    %vm1697 = vmand %vm1694, %vm1696
    %v1698 = vsel %vm1697, 1.0, 0.0
    %v1699 = vadd.f32 %v1698, 0.0
    %s1700 = sld [smem:[#allocation3 + $0x1]]
    %s1701 = sld [smem:[#allocation3 + $0x81]]
    %v1702 = vstv %s1701
    %vm1703 = vcmp.eq.s32.totalorder %v1688, %v1702
    %v1704 = vstv %s1700
    %vm1705 = vcmp.eq.s32.totalorder %v1690, %v1704
    %vm1706 = vmand %vm1703, %vm1705
    %v1707 = vsel %vm1706, 1.0, 0.0
    %v1708 = vadd.f32 %v1699, %v1707
    %s1709 = sld [smem:[#allocation3 + $0x2]]
    %s1710 = sld [smem:[#allocation3 + $0x82]]
    %v1711 = vstv %s1710
    %vm1712 = vcmp.eq.s32.totalorder %v1688, %v1711
    %v1713 = vstv %s1709
    %vm1714 = vcmp.eq.s32.totalorder %v1690, %v1713
    %vm1715 = vmand %vm1712, %vm1714
    %v1716 = vsel %vm1715, 1.0, 0.0
    %v1717 = vadd.f32 %v1708, %v1716
    %s1718 = sld [smem:[#allocation3 + $0x3]]
    %s1719 = sld [smem:[#allocation3 + $0x83]]
    %v1720 = vstv %s1719
    %vm1721 = vcmp.eq.s32.totalorder %v1688, %v1720
    %v1722 = vstv %s1718
    %vm1723 = vcmp.eq.s32.totalorder %v1690, %v1722
    %vm1724 = vmand %vm1721, %vm1723
    %v1725 = vsel %vm1724, 1.0, 0.0
    %v1726 = vadd.f32 %v1717, %v1725
    %s1727 = sld [smem:[#allocation3 + $0x4]]
    %s1728 = sld [smem:[#allocation3 + $0x84]]
    %v1729 = vstv %s1728
    %vm1730 = vcmp.eq.s32.totalorder %v1688, %v1729
    %v1731 = vstv %s1727
    %vm1732 = vcmp.eq.s32.totalorder %v1690, %v1731
    %vm1733 = vmand %vm1730, %vm1732
    %v1734 = vsel %vm1733, 1.0, 0.0
    %v1735 = vadd.f32 %v1726, %v1734
    %vm1736 = vcmask 31744
    %v1738 = vsel %vm1736, %v1735, 0
    %vm1740 = vcmask 1043456
    %v1742 = vsel %vm1740, %v1686, 0
    %1744 = vmatpush.msra.mxu0 0.0
    %1745 = vmatpush.msra.mxu0 0.0
    %1746 = vmatpush.msra.mxu0 0.0
    %1747 = vmatpush.msra.mxu0 0.0
    %1748 = vmatpush.msra.mxu0 0.0
    %1749 = vmatpush.msra.mxu0 0.0
    %1750 = vmatpush.msra.mxu0 0.0
    %1751 = vmatpush.msra.mxu0 0.0
    %1752 = vmatpush.msra.mxu0 0.0
    %1753 = vmatpush.msra.mxu0 0.0
    %1754 = vmatpush.msra.mxu0 0.0
    %1755 = vmatpush.msra.mxu0 0.0
    %1756 = vmatpush.msra.mxu0 0.0
    %1757 = vmatpush.msra.mxu0 0.0
    %1758 = vmatpush.msra.mxu0 0.0
    %1759 = vmatpush.msra.mxu0 %v1742
    %1760 = vmatmul.f32.gmra.mxu0 %v1738
    %v1761 = vpop.f32.mrf.mxu0
    %v1762 = vadd.f32 0.0, %v1761
    %1763 = vdwg.mxu0
    %v1764 = vadd.f32 %v1686, %v1762
    %v1765 = vld [vmem:[#allocation13] sm:$0xff]
    %v1766 = vld [vmem:[#allocation13 + $0x8] sm:$0xff]
    %v1767 = vld [vmem:[#allocation13 + $0x10] sm:$0xff]
    %v1768 = vld [vmem:[#allocation13 + $0x18] sm:$0xff]
    %v1769 = vld [vmem:[#allocation14] sm:$0x1]
    %v1771 = vperm.slane %v1769, 0
    %v1774 = vsel %vm1301, %v1764, 0
    %1776 = vmatpush.msra.mxu0 0.0
    %1777 = vmatpush.msra.mxu0 0.0
    %1778 = vmatpush.msra.mxu0 0.0
    %1779 = vmatpush.msra.mxu0 0.0
    %1780 = vmatpush.msra.mxu0 0.0
    %1781 = vmatpush.msra.mxu0 0.0
    %1782 = vmatpush.msra.mxu0 0.0
    %1783 = vmatpush.msra.mxu0 0.0
    %1784 = vmatpush.msra.mxu0 0.0
    %1785 = vmatpush.msra.mxu0 0.0
    %1786 = vmatpush.msra.mxu0 0.0
    %1787 = vmatpush.msra.mxu0 0.0
    %1788 = vmatpush.msra.mxu0 %v1768
    %1789 = vmatpush.msra.mxu0 %v1767
    %1790 = vmatpush.msra.mxu0 %v1766
    %1791 = vmatpush.msra.mxu0 %v1765
    %1792 = vmatmul.f32.gmra.mxu0 %v1774
    %v1793 = vpop.f32.mrf.mxu0
    %v1794 = vadd.f32 %v1771, %v1793
    %1795 = vdwg.mxu0
    %v1796 = vmax.f32 %v1794, 0.0
    %v1797 = vld [vmem:[#allocation16] sm:$0xff]
    %v1798 = vld [vmem:[#allocation16 + $0x8] sm:$0xff]
    %v1799 = vld [vmem:[#allocation16 + $0x10] sm:$0xff]
    %v1800 = vld [vmem:[#allocation16 + $0x18] sm:$0xff]
    %v1801 = vld [vmem:[%s11] sm:$0x1]
    %v1803 = vperm.slane %v1801, 0
    %v1806 = vsel %vm1301, %v1796, 0
    %1808 = vmatpush.msra.mxu0 0.0
    %1809 = vmatpush.msra.mxu0 0.0
    %1810 = vmatpush.msra.mxu0 0.0
    %1811 = vmatpush.msra.mxu0 0.0
    %1812 = vmatpush.msra.mxu0 0.0
    %1813 = vmatpush.msra.mxu0 0.0
    %1814 = vmatpush.msra.mxu0 0.0
    %1815 = vmatpush.msra.mxu0 0.0
    %1816 = vmatpush.msra.mxu0 0.0
    %1817 = vmatpush.msra.mxu0 0.0
    %1818 = vmatpush.msra.mxu0 0.0
    %1819 = vmatpush.msra.mxu0 0.0
    %1820 = vmatpush.msra.mxu0 %v1800
    %1821 = vmatpush.msra.mxu0 %v1799
    %1822 = vmatpush.msra.mxu0 %v1798
    %1823 = vmatpush.msra.mxu0 %v1797
    %1824 = vmatmul.f32.gmra.mxu0 %v1806
    %v1825 = vpop.f32.mrf.mxu0
    %v1826 = vadd.f32 %v1803, %v1825
    %1827 = vdwg.mxu0
    %v1829 = vsel %vm1740, %v1826, 0
    %1831 = vmatpush.msra.mxu0 0.0
    %1832 = vmatpush.msra.mxu0 0.0
    %1833 = vmatpush.msra.mxu0 0.0
    %1834 = vmatpush.msra.mxu0 0.0
    %1835 = vmatpush.msra.mxu0 0.0
    %1836 = vmatpush.msra.mxu0 0.0
    %1837 = vmatpush.msra.mxu0 0.0
    %1838 = vmatpush.msra.mxu0 0.0
    %1839 = vmatpush.msra.mxu0 0.0
    %1840 = vmatpush.msra.mxu0 0.0
    %1841 = vmatpush.msra.mxu0 0.0
    %1842 = vmatpush.msra.mxu0 0.0
    %1843 = vmatpush.msra.mxu0 0.0
    %1844 = vmatpush.msra.mxu0 0.0
    %1845 = vmatpush.msra.mxu0 0.0
    %1846 = vmatpush.msra.mxu0 %v1829
    %1847 = vmatmul.f32.gmra.mxu0 %v1738
    %v1848 = vpop.f32.mrf.mxu0
    %v1849 = vadd.f32 0.0, %v1848
    %1850 = vdwg.mxu0
    %v1851 = vadd.f32 %v1826, %v1849
    %v1852 = vld [vmem:[#allocation17] sm:$0xff]
    %v1853 = vld [vmem:[#allocation17 + $0x8] sm:$0xff]
    %v1854 = vld [vmem:[#allocation17 + $0x10] sm:$0xff]
    %v1855 = vld [vmem:[#allocation17 + $0x18] sm:$0xff]
    %v1856 = vld [vmem:[%s13] sm:$0x1]
    %v1858 = vperm.slane %v1856, 0
    %v1861 = vsel %vm1301, %v1851, 0
    %1863 = vmatpush.msra.mxu0 0.0
    %1864 = vmatpush.msra.mxu0 0.0
    %1865 = vmatpush.msra.mxu0 0.0
    %1866 = vmatpush.msra.mxu0 0.0
    %1867 = vmatpush.msra.mxu0 0.0
    %1868 = vmatpush.msra.mxu0 0.0
    %1869 = vmatpush.msra.mxu0 0.0
    %1870 = vmatpush.msra.mxu0 0.0
    %1871 = vmatpush.msra.mxu0 0.0
    %1872 = vmatpush.msra.mxu0 0.0
    %1873 = vmatpush.msra.mxu0 0.0
    %1874 = vmatpush.msra.mxu0 0.0
    %1875 = vmatpush.msra.mxu0 %v1855
    %1876 = vmatpush.msra.mxu0 %v1854
    %1877 = vmatpush.msra.mxu0 %v1853
    %1878 = vmatpush.msra.mxu0 %v1852
    %1879 = vmatmul.f32.gmra.mxu0 %v1861
    %v1880 = vpop.f32.mrf.mxu0
    %v1881 = vadd.f32 %v1858, %v1880
    %1882 = vdwg.mxu0
    %v1883 = vmax.f32 %v1881, 0.0
    %v1884 = vld [vmem:[%s14] sm:$0xff]
    %v1885 = vld [vmem:[%s14 + $0x8] sm:$0xff]
    %v1886 = vld [vmem:[%s14 + $0x10] sm:$0xff]
    %v1887 = vld [vmem:[%s14 + $0x18] sm:$0xff]
    %v1888 = vld [vmem:[%s15] sm:$0x1]
    %v1890 = vperm.slane %v1888, 0
    %v1893 = vsel %vm1301, %v1883, 0
    %1895 = vmatpush.msra.mxu0 0.0
    %1896 = vmatpush.msra.mxu0 0.0
    %1897 = vmatpush.msra.mxu0 0.0
    %1898 = vmatpush.msra.mxu0 0.0
    %1899 = vmatpush.msra.mxu0 0.0
    %1900 = vmatpush.msra.mxu0 0.0
    %1901 = vmatpush.msra.mxu0 0.0
    %1902 = vmatpush.msra.mxu0 0.0
    %1903 = vmatpush.msra.mxu0 0.0
    %1904 = vmatpush.msra.mxu0 0.0
    %1905 = vmatpush.msra.mxu0 0.0
    %1906 = vmatpush.msra.mxu0 0.0
    %1907 = vmatpush.msra.mxu0 %v1887
    %1908 = vmatpush.msra.mxu0 %v1886
    %1909 = vmatpush.msra.mxu0 %v1885
    %1910 = vmatpush.msra.mxu0 %v1884
    %1911 = vmatmul.f32.gmra.mxu0 %v1893
    %v1912 = vpop.f32.mrf.mxu0
    %v1913 = vadd.f32 %v1890, %v1912
    %1914 = vdwg.mxu0
    %v1915 = vtanh.pop %v1913
    %v1916 = vld [vmem:[%s16] sm:$0xff]
    %v1917 = vld [vmem:[%s16 + $0x8] sm:$0xff]
    %v1918 = vld [vmem:[%s16 + $0x10] sm:$0xff]
    %v1919 = vld [vmem:[%s16 + $0x18] sm:$0xff]
    %v1920 = vld [vmem:[%s17] sm:$0x1]
    %v1922 = vperm.slane %v1920, 0
    %v1925 = vsel %vm1301, %v1915, 0
    %1927 = vmatpush.msra.mxu0 0.0
    %1928 = vmatpush.msra.mxu0 0.0
    %1929 = vmatpush.msra.mxu0 0.0
    %1930 = vmatpush.msra.mxu0 0.0
    %1931 = vmatpush.msra.mxu0 0.0
    %1932 = vmatpush.msra.mxu0 0.0
    %1933 = vmatpush.msra.mxu0 0.0
    %1934 = vmatpush.msra.mxu0 0.0
    %1935 = vmatpush.msra.mxu0 0.0
    %1936 = vmatpush.msra.mxu0 0.0
    %1937 = vmatpush.msra.mxu0 0.0
    %1938 = vmatpush.msra.mxu0 0.0
    %1939 = vmatpush.msra.mxu0 %v1919
    %1940 = vmatpush.msra.mxu0 %v1918
    %1941 = vmatpush.msra.mxu0 %v1917
    %1942 = vmatpush.msra.mxu0 %v1916
    %1943 = vmatmul.f32.gmra.mxu0 %v1925
    %v1944 = vpop.f32.mrf.mxu0
    %v1945 = vadd.f32 %v1922, %v1944
    %1946 = vdwg.mxu0
    %vm1947 = vcmask 27648
    %1948 = vst.msk [vmem:[#allocation19] sm:$0xf] %vm1947, %v1945
    // Predicated region
    $region110: #{model_forward.1} parent=1 // pred_check
      _
    $region111: #{model_forward.1} parent=1 // pred_check_branch
      %1950 = sbr.rel (0) target = $region113
    $region112: #{model_forward.1} parent=1 // pred_region
      %1952 = vsyncadd [#allocation5], 0
      %s1954 = sshll.u32 [#allocation19], 4
      %s1955 = int_to_ptr.vmem [resolvable:$true] %s1954
      %s1956 = sshll.u32 %s18, 4
      %s1957 = int_to_ptr.hbm [resolvable:$true] %s1956
      %1959 = dma.vmem_to_hbm [thread:$0]  %s1955, 64, %s1957, [#allocation5]
    $region113: #{model_forward.1} parent=1 // pred_fallthru
      _
    // Predicated region
    $region114: #{model_forward.1} parent=1 // pred_check
      _
    $region115: #{model_forward.1} parent=1 // pred_check_branch
      %1961 = sbr.rel (0) target = $region117
    $region116: #{model_forward.1} parent=1 // pred_region
      %1963 = dma.done [#allocation5], 64
    $region117: #{model_forward.1} parent=1 // pred_fallthru
      _
    %1964 = vsyncpa [#allocation4], 1
    %1965 = vsyncpa [#allocation9], 1
    %1966 = vsyncpa [#allocation12], 1
    %1967 = vsyncpa [#allocation15], 1
    %1968 = vsyncpa [#allocation18], 1
    %1969 = vsyncpa [#allocation5], 1
    %1970 = vsyncpa [#allocation6], 1

</llo_original>
